<compile_context>
chip_gen: v7x
topology: tpu7x:2x2x1
jax: 0.10.0
libtpu: 0.0.40
codegen_flags: <defaults>
</compile_context>

<pallas_src>
import jax
import jax.numpy as jnp
from jax.experimental import pallas as pl
from jax.experimental.pallas import tpu as pltpu

# ---- Izhikevich constants (defaults of izhikevech.__init__, h=0.1, u0=0) ----
IZ_K     = 0.4471817006977834
IZ_A     = 0.0032799410036917333
IZ_B     = 24.478421990208606
IZ_VMIN  = -66.46563513097735
IZ_D     = 50.0
IZ_C     = 38.0
IZ_VR    = -77.40291336465064
IZ_VT    = -44.90054428048817
IZ_VPEAK = 15.489726771001997
IZ_H     = 0.1

# Folded constants (remove the per-step divide and extra multiplies from the
# serial dependence chain; ULP-level rounding difference vs. PyTorch only).
IZ_H_OVER_C = IZ_H / IZ_C          # h / C
IZ_HA       = IZ_H * IZ_A          # h * a
IZ_HAB      = IZ_H * IZ_A * IZ_B   # h * a * b

NUM_INPUTS  = 2
NUM_HIDDEN  = 4
NUM_OUTPUTS = 2
NUM_STEPS   = 8
BATCH       = 2


def _iz_step(v, u, I):
    """One Izhikevich neuron update, elementwise over (batch, neurons)."""
    spiked = v >= IZ_VPEAK
    # non-spiking branch (u update uses the *new* v, exactly as in the PyTorch code)
    v_else = v + IZ_H_OVER_C * (IZ_K * (v - IZ_VR) * (v - IZ_VT) - u + I)
    u_else = u + IZ_HAB * (v_else - IZ_VR) - IZ_HA * u
    # spiking branch (reset)
    v_new = jnp.where(spiked, IZ_VMIN, v_else)
    u_new = jnp.where(spiked, u + IZ_D, u_else)
    spk = spiked.astype(jnp.float32)
    return spk, v_new, u_new


def net_kernel(x_ref, w1_ref, b1_ref, w2_ref, b2_ref, out_ref):
    num_steps, batch, num_in = x_ref.shape
    n_hid = w1_ref.shape[1]
    n_out = w2_ref.shape[1]

    # Read parameters from VMEM once (hoisted out of the time loop).
    w1 = w1_ref[...]
    b1 = b1_ref[...]
    w2 = w2_ref[...]
    b2 = b2_ref[...]

    # ---- fc1 for ALL steps at once (no dependence on neuron state) --------
    # cur1_all[t, b, h] = sum_k x[t, b, k] * w1[k, h] + b1[0, h]
    x_all = x_ref[...]                                    # (steps, batch, in)
    cur1_all = x_all[:, :, 0:1] * w1[0:1, :]              # (steps, batch, n_hid)
    for k in range(1, num_in):
        cur1_all = cur1_all + x_all[:, :, k:k + 1] * w1[k:k + 1, :]
    cur1_all = cur1_all + b1                              # (1, n_hid) broadcast

    # ---- hoist loop-invariant fc2 broadcasts --------------------------------
    w2_rows = [jnp.broadcast_to(w2[k:k + 1, :], (batch, n_out))
               for k in range(n_hid)]
    b2_b = jnp.broadcast_to(b2, (batch, n_out))

    # ---- recurrence state lives in registers --------------------------------
    mem1 = jnp.full((batch, n_hid), IZ_VR, dtype=jnp.float32)   # iz1.v = Vr
    u1   = jnp.zeros((batch, n_hid), dtype=jnp.float32)         # iz1.u = 0
    mem2 = jnp.full((batch, n_out), IZ_VR, dtype=jnp.float32)   # iz2.v = Vr
    u2   = jnp.zeros((batch, n_out), dtype=jnp.float32)         # iz2.u = 0

    # ---- statically unrolled time loop --------------------------------------
    for step in range(num_steps):
        cur1 = cur1_all[step]                                   # (batch, n_hid)
        spk1, mem1, u1 = _iz_step(mem1, u1, cur1)

        # fc2: unrolled-K VPU broadcast MACs (weight rows pre-broadcast)
        cur2 = b2_b + spk1[:, 0:1] * w2_rows[0]
        for k in range(1, n_hid):
            cur2 = cur2 + spk1[:, k:k + 1] * w2_rows[k]

        spk2, mem2, u2 = _iz_step(mem2, u2, cur2)

        # Lane-dense merged output: [spk2(step) | mem2(step)] blocks of n_out
        # columns each, all in one (batch, steps*2*n_out) VMEM tile.
        c0 = step * 2 * n_out
        out_ref[:, c0:c0 + n_out] = spk2
        out_ref[:, c0 + n_out:c0 + 2 * n_out] = mem2


def net_forward(x, w1, b1, w2, b2):
    num_steps, batch, _ = x.shape
    n_out = w2.shape[1]

    vmem_spec = pl.BlockSpec(memory_space=pltpu.MemorySpace.VMEM)

    merged = pl.pallas_call(
        net_kernel,
        out_shape=jax.ShapeDtypeStruct((batch, num_steps * 2 * n_out),
                                       jnp.float32),
        in_specs=[vmem_spec] * 5,       # everything resident in VMEM (tiny)
        out_specs=vmem_spec,            # single-tile output, one writeback DMA
    )(x, w1, b1, w2, b2)

    # Layout plumbing back to the module's (num_steps, batch, n_out) outputs.
    r = merged.reshape(batch, num_steps, 2, n_out)
    spk2_rec = jnp.transpose(r[:, :, 0, :], (1, 0, 2))
    mem2_rec = jnp.transpose(r[:, :, 1, :], (1, 0, 2))
    return spk2_rec, mem2_rec


def init_params(key):
    """Deterministic Linear init (uniform(-1/sqrt(fan_in), 1/sqrt(fan_in)))."""
    k1, k2, k3, k4 = jax.random.split(key, 4)
    bound1 = 1.0 / jnp.sqrt(NUM_INPUTS)
    bound2 = 1.0 / jnp.sqrt(NUM_HIDDEN)
    w1 = jax.random.uniform(k1, (NUM_INPUTS, NUM_HIDDEN),  jnp.float32, -bound1, bound1)
    b1 = jax.random.uniform(k2, (1, NUM_HIDDEN),           jnp.float32, -bound1, bound1)
    w2 = jax.random.uniform(k3, (NUM_HIDDEN, NUM_OUTPUTS), jnp.float32, -bound2, bound2)
    b2 = jax.random.uniform(k4, (1, NUM_OUTPUTS),          jnp.float32, -bound2, bound2)
    return w1, b1, w2, b2


if __name__ == "__main__":
    key = jax.random.PRNGKey(0)
    kx, kp = jax.random.split(key)

    # input spike train: [num_steps, batch, num_inputs] of {0,1}
    x = (jax.random.uniform(kx, (NUM_STEPS, BATCH, NUM_INPUTS)) < 0.5).astype(jnp.float32)
    w1, b1, w2, b2 = init_params(kp)

    spk2_rec, mem2_rec = net_forward(x, w1, b1, w2, b2)
    jax.block_until_ready((spk2_rec, mem2_rec))

    assert spk2_rec.shape == (NUM_STEPS, BATCH, NUM_OUTPUTS)
    assert mem2_rec.shape == (NUM_STEPS, BATCH, NUM_OUTPUTS)
    print("KERNEL_OK")
</pallas_src>

<mosaic_0001>
module attributes {stable_mosaic.version = 11 : i64} {
  func.func @net_kernel(%arg0: memref<8x2x2xf32, #tpu.memory_space<vmem>>, %arg1: memref<2x4xf32, #tpu.memory_space<vmem>>, %arg2: memref<1x4xf32, #tpu.memory_space<vmem>>, %arg3: memref<4x2xf32, #tpu.memory_space<vmem>>, %arg4: memref<1x2xf32, #tpu.memory_space<vmem>>, %arg5: memref<2x32xf32, #tpu.memory_space<vmem>>) attributes {dimension_semantics = [], scalar_prefetch = 0 : i64, scratch_operands = 0 : i64, tpu.core_type = #tpu.core_type<tc>} {
    %c0 = arith.constant 0 : index
    %c0_0 = arith.constant 0 : index
    %0 = vector.load %arg1[%c0, %c0_0] : memref<2x4xf32, #tpu.memory_space<vmem>>, vector<2x4xf32>
    %c0_1 = arith.constant 0 : index
    %c0_2 = arith.constant 0 : index
    %1 = vector.load %arg2[%c0_1, %c0_2] : memref<1x4xf32, #tpu.memory_space<vmem>>, vector<1x4xf32>
    %c0_3 = arith.constant 0 : index
    %c0_4 = arith.constant 0 : index
    %2 = vector.load %arg3[%c0_3, %c0_4] : memref<4x2xf32, #tpu.memory_space<vmem>>, vector<4x2xf32>
    %c0_5 = arith.constant 0 : index
    %c0_6 = arith.constant 0 : index
    %3 = vector.load %arg4[%c0_5, %c0_6] : memref<1x2xf32, #tpu.memory_space<vmem>>, vector<1x2xf32>
    %c0_7 = arith.constant 0 : index
    %c0_8 = arith.constant 0 : index
    %c0_9 = arith.constant 0 : index
    %4 = vector.load %arg0[%c0_7, %c0_8, %c0_9] : memref<8x2x2xf32, #tpu.memory_space<vmem>>, vector<8x2x2xf32>
    %5 = vector.extract_strided_slice %4 {offsets = [0, 0, 0], sizes = [8, 2, 1], strides = [1, 1, 1]} : vector<8x2x2xf32> to vector<8x2x1xf32>
    %6 = vector.extract_strided_slice %0 {offsets = [0, 0], sizes = [1, 4], strides = [1, 1]} : vector<2x4xf32> to vector<1x4xf32>
    %7 = vector.shape_cast %6 : vector<1x4xf32> to vector<1x1x4xf32>
    %8 = vector.broadcast %5 : vector<8x2x1xf32> to vector<8x2x4xf32>
    %9 = vector.broadcast %7 : vector<1x1x4xf32> to vector<8x2x4xf32>
    %10 = arith.mulf %8, %9 : vector<8x2x4xf32>
    %11 = vector.extract_strided_slice %4 {offsets = [0, 0, 1], sizes = [8, 2, 1], strides = [1, 1, 1]} : vector<8x2x2xf32> to vector<8x2x1xf32>
    %12 = vector.extract_strided_slice %0 {offsets = [1, 0], sizes = [1, 4], strides = [1, 1]} : vector<2x4xf32> to vector<1x4xf32>
    %13 = vector.shape_cast %12 : vector<1x4xf32> to vector<1x1x4xf32>
    %14 = vector.broadcast %11 : vector<8x2x1xf32> to vector<8x2x4xf32>
    %15 = vector.broadcast %13 : vector<1x1x4xf32> to vector<8x2x4xf32>
    %16 = arith.mulf %14, %15 : vector<8x2x4xf32>
    %17 = arith.addf %10, %16 : vector<8x2x4xf32>
    %18 = vector.shape_cast %1 : vector<1x4xf32> to vector<1x1x4xf32>
    %19 = vector.broadcast %18 : vector<1x1x4xf32> to vector<8x2x4xf32>
    %20 = arith.addf %17, %19 : vector<8x2x4xf32>
    %21 = vector.extract_strided_slice %2 {offsets = [0, 0], sizes = [1, 2], strides = [1, 1]} : vector<4x2xf32> to vector<1x2xf32>
    %22 = vector.shape_cast %21 : vector<1x2xf32> to vector<1x2xf32>
    %23 = vector.broadcast %22 : vector<1x2xf32> to vector<2x2xf32>
    %24 = vector.extract_strided_slice %2 {offsets = [1, 0], sizes = [1, 2], strides = [1, 1]} : vector<4x2xf32> to vector<1x2xf32>
    %25 = vector.shape_cast %24 : vector<1x2xf32> to vector<1x2xf32>
    %26 = vector.broadcast %25 : vector<1x2xf32> to vector<2x2xf32>
    %27 = vector.extract_strided_slice %2 {offsets = [2, 0], sizes = [1, 2], strides = [1, 1]} : vector<4x2xf32> to vector<1x2xf32>
    %28 = vector.shape_cast %27 : vector<1x2xf32> to vector<1x2xf32>
    %29 = vector.broadcast %28 : vector<1x2xf32> to vector<2x2xf32>
    %30 = vector.extract_strided_slice %2 {offsets = [3, 0], sizes = [1, 2], strides = [1, 1]} : vector<4x2xf32> to vector<1x2xf32>
    %31 = vector.shape_cast %30 : vector<1x2xf32> to vector<1x2xf32>
    %32 = vector.broadcast %31 : vector<1x2xf32> to vector<2x2xf32>
    %33 = vector.shape_cast %3 : vector<1x2xf32> to vector<1x2xf32>
    %34 = vector.broadcast %33 : vector<1x2xf32> to vector<2x2xf32>
    %cst = arith.constant -77.402916 : f32
    %35 = vector.broadcast %cst : f32 to vector<2x4xf32>
    %cst_10 = arith.constant 0.000000e+00 : f32
    %36 = vector.broadcast %cst_10 : f32 to vector<2x4xf32>
    %cst_11 = arith.constant -77.402916 : f32
    %37 = vector.broadcast %cst_11 : f32 to vector<2x2xf32>
    %cst_12 = arith.constant 0.000000e+00 : f32
    %38 = vector.broadcast %cst_12 : f32 to vector<2x2xf32>
    %39 = vector.extract_strided_slice %20 {offsets = [0, 0, 0], sizes = [1, 2, 4], strides = [1, 1, 1]} : vector<8x2x4xf32> to vector<1x2x4xf32>
    %40 = vector.shape_cast %39 : vector<1x2x4xf32> to vector<2x4xf32>
    %cst_13 = arith.constant 15.489727 : f32
    %41 = vector.broadcast %cst_13 : f32 to vector<2x4xf32>
    %42 = arith.cmpf oge, %35, %41 : vector<2x4xf32>
    %cst_14 = arith.constant -77.402916 : f32
    %43 = vector.broadcast %cst_14 : f32 to vector<2x4xf32>
    %44 = arith.subf %35, %43 : vector<2x4xf32>
    %cst_15 = arith.constant 0.447181702 : f32
    %45 = vector.broadcast %cst_15 : f32 to vector<2x4xf32>
    %46 = arith.mulf %45, %44 : vector<2x4xf32>
    %cst_16 = arith.constant -44.9005432 : f32
    %47 = vector.broadcast %cst_16 : f32 to vector<2x4xf32>
    %48 = arith.subf %35, %47 : vector<2x4xf32>
    %49 = arith.mulf %46, %48 : vector<2x4xf32>
    %50 = arith.subf %49, %36 : vector<2x4xf32>
    %51 = arith.addf %50, %40 : vector<2x4xf32>
    %cst_17 = arith.constant 0.00263157906 : f32
    %52 = vector.broadcast %cst_17 : f32 to vector<2x4xf32>
    %53 = arith.mulf %52, %51 : vector<2x4xf32>
    %54 = arith.addf %35, %53 : vector<2x4xf32>
    %cst_18 = arith.constant -77.402916 : f32
    %55 = vector.broadcast %cst_18 : f32 to vector<2x4xf32>
    %56 = arith.subf %54, %55 : vector<2x4xf32>
    %cst_19 = arith.constant 0.00802877825 : f32
    %57 = vector.broadcast %cst_19 : f32 to vector<2x4xf32>
    %58 = arith.mulf %57, %56 : vector<2x4xf32>
    %59 = arith.addf %36, %58 : vector<2x4xf32>
    %cst_20 = arith.constant 3.27994087E-4 : f32
    %60 = vector.broadcast %cst_20 : f32 to vector<2x4xf32>
    %61 = arith.mulf %60, %36 : vector<2x4xf32>
    %62 = arith.subf %59, %61 : vector<2x4xf32>
    %cst_21 = arith.constant -66.4656372 : f32
    %63 = vector.broadcast %cst_21 : f32 to vector<2x4xf32>
    %64 = arith.select %42, %63, %54 : vector<2x4xi1>, vector<2x4xf32>
    %cst_22 = arith.constant 5.000000e+01 : f32
    %65 = vector.broadcast %cst_22 : f32 to vector<2x4xf32>
    %66 = arith.addf %36, %65 : vector<2x4xf32>
    %67 = arith.select %42, %66, %62 : vector<2x4xi1>, vector<2x4xf32>
    %68 = arith.extui %42 : vector<2x4xi1> to vector<2x4xi32>
    %69 = arith.sitofp %68 : vector<2x4xi32> to vector<2x4xf32>
    %70 = vector.extract_strided_slice %69 {offsets = [0, 0], sizes = [2, 1], strides = [1, 1]} : vector<2x4xf32> to vector<2x1xf32>
    %71 = vector.broadcast %70 : vector<2x1xf32> to vector<2x2xf32>
    %72 = arith.mulf %71, %23 : vector<2x2xf32>
    %73 = arith.addf %34, %72 : vector<2x2xf32>
    %74 = vector.extract_strided_slice %69 {offsets = [0, 1], sizes = [2, 1], strides = [1, 1]} : vector<2x4xf32> to vector<2x1xf32>
    %75 = vector.broadcast %74 : vector<2x1xf32> to vector<2x2xf32>
    %76 = arith.mulf %75, %26 : vector<2x2xf32>
    %77 = arith.addf %73, %76 : vector<2x2xf32>
    %78 = vector.extract_strided_slice %69 {offsets = [0, 2], sizes = [2, 1], strides = [1, 1]} : vector<2x4xf32> to vector<2x1xf32>
    %79 = vector.broadcast %78 : vector<2x1xf32> to vector<2x2xf32>
    %80 = arith.mulf %79, %29 : vector<2x2xf32>
    %81 = arith.addf %77, %80 : vector<2x2xf32>
    %82 = vector.extract_strided_slice %69 {offsets = [0, 3], sizes = [2, 1], strides = [1, 1]} : vector<2x4xf32> to vector<2x1xf32>
    %83 = vector.broadcast %82 : vector<2x1xf32> to vector<2x2xf32>
    %84 = arith.mulf %83, %32 : vector<2x2xf32>
    %85 = arith.addf %81, %84 : vector<2x2xf32>
    %cst_23 = arith.constant 15.489727 : f32
    %86 = vector.broadcast %cst_23 : f32 to vector<2x2xf32>
    %87 = arith.cmpf oge, %37, %86 : vector<2x2xf32>
    %cst_24 = arith.constant -77.402916 : f32
    %88 = vector.broadcast %cst_24 : f32 to vector<2x2xf32>
    %89 = arith.subf %37, %88 : vector<2x2xf32>
    %cst_25 = arith.constant 0.447181702 : f32
    %90 = vector.broadcast %cst_25 : f32 to vector<2x2xf32>
    %91 = arith.mulf %90, %89 : vector<2x2xf32>
    %cst_26 = arith.constant -44.9005432 : f32
    %92 = vector.broadcast %cst_26 : f32 to vector<2x2xf32>
    %93 = arith.subf %37, %92 : vector<2x2xf32>
    %94 = arith.mulf %91, %93 : vector<2x2xf32>
    %95 = arith.subf %94, %38 : vector<2x2xf32>
    %96 = arith.addf %95, %85 : vector<2x2xf32>
    %cst_27 = arith.constant 0.00263157906 : f32
    %97 = vector.broadcast %cst_27 : f32 to vector<2x2xf32>
    %98 = arith.mulf %97, %96 : vector<2x2xf32>
    %99 = arith.addf %37, %98 : vector<2x2xf32>
    %cst_28 = arith.constant -77.402916 : f32
    %100 = vector.broadcast %cst_28 : f32 to vector<2x2xf32>
    %101 = arith.subf %99, %100 : vector<2x2xf32>
    %cst_29 = arith.constant 0.00802877825 : f32
    %102 = vector.broadcast %cst_29 : f32 to vector<2x2xf32>
    %103 = arith.mulf %102, %101 : vector<2x2xf32>
    %104 = arith.addf %38, %103 : vector<2x2xf32>
    %cst_30 = arith.constant 3.27994087E-4 : f32
    %105 = vector.broadcast %cst_30 : f32 to vector<2x2xf32>
    %106 = arith.mulf %105, %38 : vector<2x2xf32>
    %107 = arith.subf %104, %106 : vector<2x2xf32>
    %cst_31 = arith.constant -66.4656372 : f32
    %108 = vector.broadcast %cst_31 : f32 to vector<2x2xf32>
    %109 = arith.select %87, %108, %99 : vector<2x2xi1>, vector<2x2xf32>
    %cst_32 = arith.constant 5.000000e+01 : f32
    %110 = vector.broadcast %cst_32 : f32 to vector<2x2xf32>
    %111 = arith.addf %38, %110 : vector<2x2xf32>
    %112 = arith.select %87, %111, %107 : vector<2x2xi1>, vector<2x2xf32>
    %113 = arith.extui %87 : vector<2x2xi1> to vector<2x2xi32>
    %114 = arith.sitofp %113 : vector<2x2xi32> to vector<2x2xf32>
    %c0_33 = arith.constant 0 : index
    %c0_34 = arith.constant 0 : index
    %115 = vector.load %arg5[%c0_33, %c0_34] : memref<2x32xf32, #tpu.memory_space<vmem>>, vector<2x2xf32>
    tpu.vector_store %arg5[%c0_33, %c0_34], %114 {strides = array<i32>} : memref<2x32xf32, #tpu.memory_space<vmem>>, vector<2x2xf32>,
    %c0_35 = arith.constant 0 : index
    %c2 = arith.constant 2 : index
    %116 = vector.load %arg5[%c0_35, %c2] : memref<2x32xf32, #tpu.memory_space<vmem>>, vector<2x2xf32>
    tpu.vector_store %arg5[%c0_35, %c2], %109 {strides = array<i32>} : memref<2x32xf32, #tpu.memory_space<vmem>>, vector<2x2xf32>,
    %117 = vector.extract_strided_slice %20 {offsets = [1, 0, 0], sizes = [1, 2, 4], strides = [1, 1, 1]} : vector<8x2x4xf32> to vector<1x2x4xf32>
    %118 = vector.shape_cast %117 : vector<1x2x4xf32> to vector<2x4xf32>
    %cst_36 = arith.constant 15.489727 : f32
    %119 = vector.broadcast %cst_36 : f32 to vector<2x4xf32>
    %120 = arith.cmpf oge, %64, %119 : vector<2x4xf32>
    %cst_37 = arith.constant -77.402916 : f32
    %121 = vector.broadcast %cst_37 : f32 to vector<2x4xf32>
    %122 = arith.subf %64, %121 : vector<2x4xf32>
    %cst_38 = arith.constant 0.447181702 : f32
    %123 = vector.broadcast %cst_38 : f32 to vector<2x4xf32>
    %124 = arith.mulf %123, %122 : vector<2x4xf32>
    %cst_39 = arith.constant -44.9005432 : f32
    %125 = vector.broadcast %cst_39 : f32 to vector<2x4xf32>
    %126 = arith.subf %64, %125 : vector<2x4xf32>
    %127 = arith.mulf %124, %126 : vector<2x4xf32>
    %128 = arith.subf %127, %67 : vector<2x4xf32>
    %129 = arith.addf %128, %118 : vector<2x4xf32>
    %cst_40 = arith.constant 0.00263157906 : f32
    %130 = vector.broadcast %cst_40 : f32 to vector<2x4xf32>
    %131 = arith.mulf %130, %129 : vector<2x4xf32>
    %132 = arith.addf %64, %131 : vector<2x4xf32>
    %cst_41 = arith.constant -77.402916 : f32
    %133 = vector.broadcast %cst_41 : f32 to vector<2x4xf32>
    %134 = arith.subf %132, %133 : vector<2x4xf32>
    %cst_42 = arith.constant 0.00802877825 : f32
    %135 = vector.broadcast %cst_42 : f32 to vector<2x4xf32>
    %136 = arith.mulf %135, %134 : vector<2x4xf32>
    %137 = arith.addf %67, %136 : vector<2x4xf32>
    %cst_43 = arith.constant 3.27994087E-4 : f32
    %138 = vector.broadcast %cst_43 : f32 to vector<2x4xf32>
    %139 = arith.mulf %138, %67 : vector<2x4xf32>
    %140 = arith.subf %137, %139 : vector<2x4xf32>
    %cst_44 = arith.constant -66.4656372 : f32
    %141 = vector.broadcast %cst_44 : f32 to vector<2x4xf32>
    %142 = arith.select %120, %141, %132 : vector<2x4xi1>, vector<2x4xf32>
    %cst_45 = arith.constant 5.000000e+01 : f32
    %143 = vector.broadcast %cst_45 : f32 to vector<2x4xf32>
    %144 = arith.addf %67, %143 : vector<2x4xf32>
    %145 = arith.select %120, %144, %140 : vector<2x4xi1>, vector<2x4xf32>
    %146 = arith.extui %120 : vector<2x4xi1> to vector<2x4xi32>
    %147 = arith.sitofp %146 : vector<2x4xi32> to vector<2x4xf32>
    %148 = vector.extract_strided_slice %147 {offsets = [0, 0], sizes = [2, 1], strides = [1, 1]} : vector<2x4xf32> to vector<2x1xf32>
    %149 = vector.broadcast %148 : vector<2x1xf32> to vector<2x2xf32>
    %150 = arith.mulf %149, %23 : vector<2x2xf32>
    %151 = arith.addf %34, %150 : vector<2x2xf32>
    %152 = vector.extract_strided_slice %147 {offsets = [0, 1], sizes = [2, 1], strides = [1, 1]} : vector<2x4xf32> to vector<2x1xf32>
    %153 = vector.broadcast %152 : vector<2x1xf32> to vector<2x2xf32>
    %154 = arith.mulf %153, %26 : vector<2x2xf32>
    %155 = arith.addf %151, %154 : vector<2x2xf32>
    %156 = vector.extract_strided_slice %147 {offsets = [0, 2], sizes = [2, 1], strides = [1, 1]} : vector<2x4xf32> to vector<2x1xf32>
    %157 = vector.broadcast %156 : vector<2x1xf32> to vector<2x2xf32>
    %158 = arith.mulf %157, %29 : vector<2x2xf32>
    %159 = arith.addf %155, %158 : vector<2x2xf32>
    %160 = vector.extract_strided_slice %147 {offsets = [0, 3], sizes = [2, 1], strides = [1, 1]} : vector<2x4xf32> to vector<2x1xf32>
    %161 = vector.broadcast %160 : vector<2x1xf32> to vector<2x2xf32>
    %162 = arith.mulf %161, %32 : vector<2x2xf32>
    %163 = arith.addf %159, %162 : vector<2x2xf32>
    %cst_46 = arith.constant 15.489727 : f32
    %164 = vector.broadcast %cst_46 : f32 to vector<2x2xf32>
    %165 = arith.cmpf oge, %109, %164 : vector<2x2xf32>
    %cst_47 = arith.constant -77.402916 : f32
    %166 = vector.broadcast %cst_47 : f32 to vector<2x2xf32>
    %167 = arith.subf %109, %166 : vector<2x2xf32>
    %cst_48 = arith.constant 0.447181702 : f32
    %168 = vector.broadcast %cst_48 : f32 to vector<2x2xf32>
    %169 = arith.mulf %168, %167 : vector<2x2xf32>
    %cst_49 = arith.constant -44.9005432 : f32
    %170 = vector.broadcast %cst_49 : f32 to vector<2x2xf32>
    %171 = arith.subf %109, %170 : vector<2x2xf32>
    %172 = arith.mulf %169, %171 : vector<2x2xf32>
    %173 = arith.subf %172, %112 : vector<2x2xf32>
    %174 = arith.addf %173, %163 : vector<2x2xf32>
    %cst_50 = arith.constant 0.00263157906 : f32
    %175 = vector.broadcast %cst_50 : f32 to vector<2x2xf32>
    %176 = arith.mulf %175, %174 : vector<2x2xf32>
    %177 = arith.addf %109, %176 : vector<2x2xf32>
    %cst_51 = arith.constant -77.402916 : f32
    %178 = vector.broadcast %cst_51 : f32 to vector<2x2xf32>
    %179 = arith.subf %177, %178 : vector<2x2xf32>
    %cst_52 = arith.constant 0.00802877825 : f32
    %180 = vector.broadcast %cst_52 : f32 to vector<2x2xf32>
    %181 = arith.mulf %180, %179 : vector<2x2xf32>
    %182 = arith.addf %112, %181 : vector<2x2xf32>
    %cst_53 = arith.constant 3.27994087E-4 : f32
    %183 = vector.broadcast %cst_53 : f32 to vector<2x2xf32>
    %184 = arith.mulf %183, %112 : vector<2x2xf32>
    %185 = arith.subf %182, %184 : vector<2x2xf32>
    %cst_54 = arith.constant -66.4656372 : f32
    %186 = vector.broadcast %cst_54 : f32 to vector<2x2xf32>
    %187 = arith.select %165, %186, %177 : vector<2x2xi1>, vector<2x2xf32>
    %cst_55 = arith.constant 5.000000e+01 : f32
    %188 = vector.broadcast %cst_55 : f32 to vector<2x2xf32>
    %189 = arith.addf %112, %188 : vector<2x2xf32>
    %190 = arith.select %165, %189, %185 : vector<2x2xi1>, vector<2x2xf32>
    %191 = arith.extui %165 : vector<2x2xi1> to vector<2x2xi32>
    %192 = arith.sitofp %191 : vector<2x2xi32> to vector<2x2xf32>
    %c0_56 = arith.constant 0 : index
    %c4 = arith.constant 4 : index
    %193 = vector.load %arg5[%c0_56, %c4] : memref<2x32xf32, #tpu.memory_space<vmem>>, vector<2x2xf32>
    tpu.vector_store %arg5[%c0_56, %c4], %192 {strides = array<i32>} : memref<2x32xf32, #tpu.memory_space<vmem>>, vector<2x2xf32>,
    %c0_57 = arith.constant 0 : index
    %c6 = arith.constant 6 : index
    %194 = vector.load %arg5[%c0_57, %c6] : memref<2x32xf32, #tpu.memory_space<vmem>>, vector<2x2xf32>
    tpu.vector_store %arg5[%c0_57, %c6], %187 {strides = array<i32>} : memref<2x32xf32, #tpu.memory_space<vmem>>, vector<2x2xf32>,
    %195 = vector.extract_strided_slice %20 {offsets = [2, 0, 0], sizes = [1, 2, 4], strides = [1, 1, 1]} : vector<8x2x4xf32> to vector<1x2x4xf32>
    %196 = vector.shape_cast %195 : vector<1x2x4xf32> to vector<2x4xf32>
    %cst_58 = arith.constant 15.489727 : f32
    %197 = vector.broadcast %cst_58 : f32 to vector<2x4xf32>
    %198 = arith.cmpf oge, %142, %197 : vector<2x4xf32>
    %cst_59 = arith.constant -77.402916 : f32
    %199 = vector.broadcast %cst_59 : f32 to vector<2x4xf32>
    %200 = arith.subf %142, %199 : vector<2x4xf32>
    %cst_60 = arith.constant 0.447181702 : f32
    %201 = vector.broadcast %cst_60 : f32 to vector<2x4xf32>
    %202 = arith.mulf %201, %200 : vector<2x4xf32>
    %cst_61 = arith.constant -44.9005432 : f32
    %203 = vector.broadcast %cst_61 : f32 to vector<2x4xf32>
    %204 = arith.subf %142, %203 : vector<2x4xf32>
    %205 = arith.mulf %202, %204 : vector<2x4xf32>
    %206 = arith.subf %205, %145 : vector<2x4xf32>
    %207 = arith.addf %206, %196 : vector<2x4xf32>
    %cst_62 = arith.constant 0.00263157906 : f32
    %208 = vector.broadcast %cst_62 : f32 to vector<2x4xf32>
    %209 = arith.mulf %208, %207 : vector<2x4xf32>
    %210 = arith.addf %142, %209 : vector<2x4xf32>
    %cst_63 = arith.constant -77.402916 : f32
    %211 = vector.broadcast %cst_63 : f32 to vector<2x4xf32>
    %212 = arith.subf %210, %211 : vector<2x4xf32>
    %cst_64 = arith.constant 0.00802877825 : f32
    %213 = vector.broadcast %cst_64 : f32 to vector<2x4xf32>
    %214 = arith.mulf %213, %212 : vector<2x4xf32>
    %215 = arith.addf %145, %214 : vector<2x4xf32>
    %cst_65 = arith.constant 3.27994087E-4 : f32
    %216 = vector.broadcast %cst_65 : f32 to vector<2x4xf32>
    %217 = arith.mulf %216, %145 : vector<2x4xf32>
    %218 = arith.subf %215, %217 : vector<2x4xf32>
    %cst_66 = arith.constant -66.4656372 : f32
    %219 = vector.broadcast %cst_66 : f32 to vector<2x4xf32>
    %220 = arith.select %198, %219, %210 : vector<2x4xi1>, vector<2x4xf32>
    %cst_67 = arith.constant 5.000000e+01 : f32
    %221 = vector.broadcast %cst_67 : f32 to vector<2x4xf32>
    %222 = arith.addf %145, %221 : vector<2x4xf32>
    %223 = arith.select %198, %222, %218 : vector<2x4xi1>, vector<2x4xf32>
    %224 = arith.extui %198 : vector<2x4xi1> to vector<2x4xi32>
    %225 = arith.sitofp %224 : vector<2x4xi32> to vector<2x4xf32>
    %226 = vector.extract_strided_slice %225 {offsets = [0, 0], sizes = [2, 1], strides = [1, 1]} : vector<2x4xf32> to vector<2x1xf32>
    %227 = vector.broadcast %226 : vector<2x1xf32> to vector<2x2xf32>
    %228 = arith.mulf %227, %23 : vector<2x2xf32>
    %229 = arith.addf %34, %228 : vector<2x2xf32>
    %230 = vector.extract_strided_slice %225 {offsets = [0, 1], sizes = [2, 1], strides = [1, 1]} : vector<2x4xf32> to vector<2x1xf32>
    %231 = vector.broadcast %230 : vector<2x1xf32> to vector<2x2xf32>
    %232 = arith.mulf %231, %26 : vector<2x2xf32>
    %233 = arith.addf %229, %232 : vector<2x2xf32>
    %234 = vector.extract_strided_slice %225 {offsets = [0, 2], sizes = [2, 1], strides = [1, 1]} : vector<2x4xf32> to vector<2x1xf32>
    %235 = vector.broadcast %234 : vector<2x1xf32> to vector<2x2xf32>
    %236 = arith.mulf %235, %29 : vector<2x2xf32>
    %237 = arith.addf %233, %236 : vector<2x2xf32>
    %238 = vector.extract_strided_slice %225 {offsets = [0, 3], sizes = [2, 1], strides = [1, 1]} : vector<2x4xf32> to vector<2x1xf32>
    %239 = vector.broadcast %238 : vector<2x1xf32> to vector<2x2xf32>
    %240 = arith.mulf %239, %32 : vector<2x2xf32>
    %241 = arith.addf %237, %240 : vector<2x2xf32>
    %cst_68 = arith.constant 15.489727 : f32
    %242 = vector.broadcast %cst_68 : f32 to vector<2x2xf32>
    %243 = arith.cmpf oge, %187, %242 : vector<2x2xf32>
    %cst_69 = arith.constant -77.402916 : f32
    %244 = vector.broadcast %cst_69 : f32 to vector<2x2xf32>
    %245 = arith.subf %187, %244 : vector<2x2xf32>
    %cst_70 = arith.constant 0.447181702 : f32
    %246 = vector.broadcast %cst_70 : f32 to vector<2x2xf32>
    %247 = arith.mulf %246, %245 : vector<2x2xf32>
    %cst_71 = arith.constant -44.9005432 : f32
    %248 = vector.broadcast %cst_71 : f32 to vector<2x2xf32>
    %249 = arith.subf %187, %248 : vector<2x2xf32>
    %250 = arith.mulf %247, %249 : vector<2x2xf32>
    %251 = arith.subf %250, %190 : vector<2x2xf32>
    %252 = arith.addf %251, %241 : vector<2x2xf32>
    %cst_72 = arith.constant 0.00263157906 : f32
    %253 = vector.broadcast %cst_72 : f32 to vector<2x2xf32>
    %254 = arith.mulf %253, %252 : vector<2x2xf32>
    %255 = arith.addf %187, %254 : vector<2x2xf32>
    %cst_73 = arith.constant -77.402916 : f32
    %256 = vector.broadcast %cst_73 : f32 to vector<2x2xf32>
    %257 = arith.subf %255, %256 : vector<2x2xf32>
    %cst_74 = arith.constant 0.00802877825 : f32
    %258 = vector.broadcast %cst_74 : f32 to vector<2x2xf32>
    %259 = arith.mulf %258, %257 : vector<2x2xf32>
    %260 = arith.addf %190, %259 : vector<2x2xf32>
    %cst_75 = arith.constant 3.27994087E-4 : f32
    %261 = vector.broadcast %cst_75 : f32 to vector<2x2xf32>
    %262 = arith.mulf %261, %190 : vector<2x2xf32>
    %263 = arith.subf %260, %262 : vector<2x2xf32>
    %cst_76 = arith.constant -66.4656372 : f32
    %264 = vector.broadcast %cst_76 : f32 to vector<2x2xf32>
    %265 = arith.select %243, %264, %255 : vector<2x2xi1>, vector<2x2xf32>
    %cst_77 = arith.constant 5.000000e+01 : f32
    %266 = vector.broadcast %cst_77 : f32 to vector<2x2xf32>
    %267 = arith.addf %190, %266 : vector<2x2xf32>
    %268 = arith.select %243, %267, %263 : vector<2x2xi1>, vector<2x2xf32>
    %269 = arith.extui %243 : vector<2x2xi1> to vector<2x2xi32>
    %270 = arith.sitofp %269 : vector<2x2xi32> to vector<2x2xf32>
    %c0_78 = arith.constant 0 : index
    %c8 = arith.constant 8 : index
    %271 = vector.load %arg5[%c0_78, %c8] : memref<2x32xf32, #tpu.memory_space<vmem>>, vector<2x2xf32>
    tpu.vector_store %arg5[%c0_78, %c8], %270 {strides = array<i32>} : memref<2x32xf32, #tpu.memory_space<vmem>>, vector<2x2xf32>,
    %c0_79 = arith.constant 0 : index
    %c10 = arith.constant 10 : index
    %272 = vector.load %arg5[%c0_79, %c10] : memref<2x32xf32, #tpu.memory_space<vmem>>, vector<2x2xf32>
    tpu.vector_store %arg5[%c0_79, %c10], %265 {strides = array<i32>} : memref<2x32xf32, #tpu.memory_space<vmem>>, vector<2x2xf32>,
    %273 = vector.extract_strided_slice %20 {offsets = [3, 0, 0], sizes = [1, 2, 4], strides = [1, 1, 1]} : vector<8x2x4xf32> to vector<1x2x4xf32>
    %274 = vector.shape_cast %273 : vector<1x2x4xf32> to vector<2x4xf32>
    %cst_80 = arith.constant 15.489727 : f32
    %275 = vector.broadcast %cst_80 : f32 to vector<2x4xf32>
    %276 = arith.cmpf oge, %220, %275 : vector<2x4xf32>
    %cst_81 = arith.constant -77.402916 : f32
    %277 = vector.broadcast %cst_81 : f32 to vector<2x4xf32>
    %278 = arith.subf %220, %277 : vector<2x4xf32>
    %cst_82 = arith.constant 0.447181702 : f32
    %279 = vector.broadcast %cst_82 : f32 to vector<2x4xf32>
    %280 = arith.mulf %279, %278 : vector<2x4xf32>
    %cst_83 = arith.constant -44.9005432 : f32
    %281 = vector.broadcast %cst_83 : f32 to vector<2x4xf32>
    %282 = arith.subf %220, %281 : vector<2x4xf32>
    %283 = arith.mulf %280, %282 : vector<2x4xf32>
    %284 = arith.subf %283, %223 : vector<2x4xf32>
    %285 = arith.addf %284, %274 : vector<2x4xf32>
    %cst_84 = arith.constant 0.00263157906 : f32
    %286 = vector.broadcast %cst_84 : f32 to vector<2x4xf32>
    %287 = arith.mulf %286, %285 : vector<2x4xf32>
    %288 = arith.addf %220, %287 : vector<2x4xf32>
    %cst_85 = arith.constant -77.402916 : f32
    %289 = vector.broadcast %cst_85 : f32 to vector<2x4xf32>
    %290 = arith.subf %288, %289 : vector<2x4xf32>
    %cst_86 = arith.constant 0.00802877825 : f32
    %291 = vector.broadcast %cst_86 : f32 to vector<2x4xf32>
    %292 = arith.mulf %291, %290 : vector<2x4xf32>
    %293 = arith.addf %223, %292 : vector<2x4xf32>
    %cst_87 = arith.constant 3.27994087E-4 : f32
    %294 = vector.broadcast %cst_87 : f32 to vector<2x4xf32>
    %295 = arith.mulf %294, %223 : vector<2x4xf32>
    %296 = arith.subf %293, %295 : vector<2x4xf32>
    %cst_88 = arith.constant -66.4656372 : f32
    %297 = vector.broadcast %cst_88 : f32 to vector<2x4xf32>
    %298 = arith.select %276, %297, %288 : vector<2x4xi1>, vector<2x4xf32>
    %cst_89 = arith.constant 5.000000e+01 : f32
    %299 = vector.broadcast %cst_89 : f32 to vector<2x4xf32>
    %300 = arith.addf %223, %299 : vector<2x4xf32>
    %301 = arith.select %276, %300, %296 : vector<2x4xi1>, vector<2x4xf32>
    %302 = arith.extui %276 : vector<2x4xi1> to vector<2x4xi32>
    %303 = arith.sitofp %302 : vector<2x4xi32> to vector<2x4xf32>
    %304 = vector.extract_strided_slice %303 {offsets = [0, 0], sizes = [2, 1], strides = [1, 1]} : vector<2x4xf32> to vector<2x1xf32>
    %305 = vector.broadcast %304 : vector<2x1xf32> to vector<2x2xf32>
    %306 = arith.mulf %305, %23 : vector<2x2xf32>
    %307 = arith.addf %34, %306 : vector<2x2xf32>
    %308 = vector.extract_strided_slice %303 {offsets = [0, 1], sizes = [2, 1], strides = [1, 1]} : vector<2x4xf32> to vector<2x1xf32>
    %309 = vector.broadcast %308 : vector<2x1xf32> to vector<2x2xf32>
    %310 = arith.mulf %309, %26 : vector<2x2xf32>
    %311 = arith.addf %307, %310 : vector<2x2xf32>
    %312 = vector.extract_strided_slice %303 {offsets = [0, 2], sizes = [2, 1], strides = [1, 1]} : vector<2x4xf32> to vector<2x1xf32>
    %313 = vector.broadcast %312 : vector<2x1xf32> to vector<2x2xf32>
    %314 = arith.mulf %313, %29 : vector<2x2xf32>
    %315 = arith.addf %311, %314 : vector<2x2xf32>
    %316 = vector.extract_strided_slice %303 {offsets = [0, 3], sizes = [2, 1], strides = [1, 1]} : vector<2x4xf32> to vector<2x1xf32>
    %317 = vector.broadcast %316 : vector<2x1xf32> to vector<2x2xf32>
    %318 = arith.mulf %317, %32 : vector<2x2xf32>
    %319 = arith.addf %315, %318 : vector<2x2xf32>
    %cst_90 = arith.constant 15.489727 : f32
    %320 = vector.broadcast %cst_90 : f32 to vector<2x2xf32>
    %321 = arith.cmpf oge, %265, %320 : vector<2x2xf32>
    %cst_91 = arith.constant -77.402916 : f32
    %322 = vector.broadcast %cst_91 : f32 to vector<2x2xf32>
    %323 = arith.subf %265, %322 : vector<2x2xf32>
    %cst_92 = arith.constant 0.447181702 : f32
    %324 = vector.broadcast %cst_92 : f32 to vector<2x2xf32>
    %325 = arith.mulf %324, %323 : vector<2x2xf32>
    %cst_93 = arith.constant -44.9005432 : f32
    %326 = vector.broadcast %cst_93 : f32 to vector<2x2xf32>
    %327 = arith.subf %265, %326 : vector<2x2xf32>
    %328 = arith.mulf %325, %327 : vector<2x2xf32>
    %329 = arith.subf %328, %268 : vector<2x2xf32>
    %330 = arith.addf %329, %319 : vector<2x2xf32>
    %cst_94 = arith.constant 0.00263157906 : f32
    %331 = vector.broadcast %cst_94 : f32 to vector<2x2xf32>
    %332 = arith.mulf %331, %330 : vector<2x2xf32>
    %333 = arith.addf %265, %332 : vector<2x2xf32>
    %cst_95 = arith.constant -77.402916 : f32
    %334 = vector.broadcast %cst_95 : f32 to vector<2x2xf32>
    %335 = arith.subf %333, %334 : vector<2x2xf32>
    %cst_96 = arith.constant 0.00802877825 : f32
    %336 = vector.broadcast %cst_96 : f32 to vector<2x2xf32>
    %337 = arith.mulf %336, %335 : vector<2x2xf32>
    %338 = arith.addf %268, %337 : vector<2x2xf32>
    %cst_97 = arith.constant 3.27994087E-4 : f32
    %339 = vector.broadcast %cst_97 : f32 to vector<2x2xf32>
    %340 = arith.mulf %339, %268 : vector<2x2xf32>
    %341 = arith.subf %338, %340 : vector<2x2xf32>
    %cst_98 = arith.constant -66.4656372 : f32
    %342 = vector.broadcast %cst_98 : f32 to vector<2x2xf32>
    %343 = arith.select %321, %342, %333 : vector<2x2xi1>, vector<2x2xf32>
    %cst_99 = arith.constant 5.000000e+01 : f32
    %344 = vector.broadcast %cst_99 : f32 to vector<2x2xf32>
    %345 = arith.addf %268, %344 : vector<2x2xf32>
    %346 = arith.select %321, %345, %341 : vector<2x2xi1>, vector<2x2xf32>
    %347 = arith.extui %321 : vector<2x2xi1> to vector<2x2xi32>
    %348 = arith.sitofp %347 : vector<2x2xi32> to vector<2x2xf32>
    %c0_100 = arith.constant 0 : index
    %c12 = arith.constant 12 : index
    %349 = vector.load %arg5[%c0_100, %c12] : memref<2x32xf32, #tpu.memory_space<vmem>>, vector<2x2xf32>
    tpu.vector_store %arg5[%c0_100, %c12], %348 {strides = array<i32>} : memref<2x32xf32, #tpu.memory_space<vmem>>, vector<2x2xf32>,
    %c0_101 = arith.constant 0 : index
    %c14 = arith.constant 14 : index
    %350 = vector.load %arg5[%c0_101, %c14] : memref<2x32xf32, #tpu.memory_space<vmem>>, vector<2x2xf32>
    tpu.vector_store %arg5[%c0_101, %c14], %343 {strides = array<i32>} : memref<2x32xf32, #tpu.memory_space<vmem>>, vector<2x2xf32>,
    %351 = vector.extract_strided_slice %20 {offsets = [4, 0, 0], sizes = [1, 2, 4], strides = [1, 1, 1]} : vector<8x2x4xf32> to vector<1x2x4xf32>
    %352 = vector.shape_cast %351 : vector<1x2x4xf32> to vector<2x4xf32>
    %cst_102 = arith.constant 15.489727 : f32
    %353 = vector.broadcast %cst_102 : f32 to vector<2x4xf32>
    %354 = arith.cmpf oge, %298, %353 : vector<2x4xf32>
    %cst_103 = arith.constant -77.402916 : f32
    %355 = vector.broadcast %cst_103 : f32 to vector<2x4xf32>
    %356 = arith.subf %298, %355 : vector<2x4xf32>
    %cst_104 = arith.constant 0.447181702 : f32
    %357 = vector.broadcast %cst_104 : f32 to vector<2x4xf32>
    %358 = arith.mulf %357, %356 : vector<2x4xf32>
    %cst_105 = arith.constant -44.9005432 : f32
    %359 = vector.broadcast %cst_105 : f32 to vector<2x4xf32>
    %360 = arith.subf %298, %359 : vector<2x4xf32>
    %361 = arith.mulf %358, %360 : vector<2x4xf32>
    %362 = arith.subf %361, %301 : vector<2x4xf32>
    %363 = arith.addf %362, %352 : vector<2x4xf32>
    %cst_106 = arith.constant 0.00263157906 : f32
    %364 = vector.broadcast %cst_106 : f32 to vector<2x4xf32>
    %365 = arith.mulf %364, %363 : vector<2x4xf32>
    %366 = arith.addf %298, %365 : vector<2x4xf32>
    %cst_107 = arith.constant -77.402916 : f32
    %367 = vector.broadcast %cst_107 : f32 to vector<2x4xf32>
    %368 = arith.subf %366, %367 : vector<2x4xf32>
    %cst_108 = arith.constant 0.00802877825 : f32
    %369 = vector.broadcast %cst_108 : f32 to vector<2x4xf32>
    %370 = arith.mulf %369, %368 : vector<2x4xf32>
    %371 = arith.addf %301, %370 : vector<2x4xf32>
    %cst_109 = arith.constant 3.27994087E-4 : f32
    %372 = vector.broadcast %cst_109 : f32 to vector<2x4xf32>
    %373 = arith.mulf %372, %301 : vector<2x4xf32>
    %374 = arith.subf %371, %373 : vector<2x4xf32>
    %cst_110 = arith.constant -66.4656372 : f32
    %375 = vector.broadcast %cst_110 : f32 to vector<2x4xf32>
    %376 = arith.select %354, %375, %366 : vector<2x4xi1>, vector<2x4xf32>
    %cst_111 = arith.constant 5.000000e+01 : f32
    %377 = vector.broadcast %cst_111 : f32 to vector<2x4xf32>
    %378 = arith.addf %301, %377 : vector<2x4xf32>
    %379 = arith.select %354, %378, %374 : vector<2x4xi1>, vector<2x4xf32>
    %380 = arith.extui %354 : vector<2x4xi1> to vector<2x4xi32>
    %381 = arith.sitofp %380 : vector<2x4xi32> to vector<2x4xf32>
    %382 = vector.extract_strided_slice %381 {offsets = [0, 0], sizes = [2, 1], strides = [1, 1]} : vector<2x4xf32> to vector<2x1xf32>
    %383 = vector.broadcast %382 : vector<2x1xf32> to vector<2x2xf32>
    %384 = arith.mulf %383, %23 : vector<2x2xf32>
    %385 = arith.addf %34, %384 : vector<2x2xf32>
    %386 = vector.extract_strided_slice %381 {offsets = [0, 1], sizes = [2, 1], strides = [1, 1]} : vector<2x4xf32> to vector<2x1xf32>
    %387 = vector.broadcast %386 : vector<2x1xf32> to vector<2x2xf32>
    %388 = arith.mulf %387, %26 : vector<2x2xf32>
    %389 = arith.addf %385, %388 : vector<2x2xf32>
    %390 = vector.extract_strided_slice %381 {offsets = [0, 2], sizes = [2, 1], strides = [1, 1]} : vector<2x4xf32> to vector<2x1xf32>
    %391 = vector.broadcast %390 : vector<2x1xf32> to vector<2x2xf32>
    %392 = arith.mulf %391, %29 : vector<2x2xf32>
    %393 = arith.addf %389, %392 : vector<2x2xf32>
    %394 = vector.extract_strided_slice %381 {offsets = [0, 3], sizes = [2, 1], strides = [1, 1]} : vector<2x4xf32> to vector<2x1xf32>
    %395 = vector.broadcast %394 : vector<2x1xf32> to vector<2x2xf32>
    %396 = arith.mulf %395, %32 : vector<2x2xf32>
    %397 = arith.addf %393, %396 : vector<2x2xf32>
    %cst_112 = arith.constant 15.489727 : f32
    %398 = vector.broadcast %cst_112 : f32 to vector<2x2xf32>
    %399 = arith.cmpf oge, %343, %398 : vector<2x2xf32>
    %cst_113 = arith.constant -77.402916 : f32
    %400 = vector.broadcast %cst_113 : f32 to vector<2x2xf32>
    %401 = arith.subf %343, %400 : vector<2x2xf32>
    %cst_114 = arith.constant 0.447181702 : f32
    %402 = vector.broadcast %cst_114 : f32 to vector<2x2xf32>
    %403 = arith.mulf %402, %401 : vector<2x2xf32>
    %cst_115 = arith.constant -44.9005432 : f32
    %404 = vector.broadcast %cst_115 : f32 to vector<2x2xf32>
    %405 = arith.subf %343, %404 : vector<2x2xf32>
    %406 = arith.mulf %403, %405 : vector<2x2xf32>
    %407 = arith.subf %406, %346 : vector<2x2xf32>
    %408 = arith.addf %407, %397 : vector<2x2xf32>
    %cst_116 = arith.constant 0.00263157906 : f32
    %409 = vector.broadcast %cst_116 : f32 to vector<2x2xf32>
    %410 = arith.mulf %409, %408 : vector<2x2xf32>
    %411 = arith.addf %343, %410 : vector<2x2xf32>
    %cst_117 = arith.constant -77.402916 : f32
    %412 = vector.broadcast %cst_117 : f32 to vector<2x2xf32>
    %413 = arith.subf %411, %412 : vector<2x2xf32>
    %cst_118 = arith.constant 0.00802877825 : f32
    %414 = vector.broadcast %cst_118 : f32 to vector<2x2xf32>
    %415 = arith.mulf %414, %413 : vector<2x2xf32>
    %416 = arith.addf %346, %415 : vector<2x2xf32>
    %cst_119 = arith.constant 3.27994087E-4 : f32
    %417 = vector.broadcast %cst_119 : f32 to vector<2x2xf32>
    %418 = arith.mulf %417, %346 : vector<2x2xf32>
    %419 = arith.subf %416, %418 : vector<2x2xf32>
    %cst_120 = arith.constant -66.4656372 : f32
    %420 = vector.broadcast %cst_120 : f32 to vector<2x2xf32>
    %421 = arith.select %399, %420, %411 : vector<2x2xi1>, vector<2x2xf32>
    %cst_121 = arith.constant 5.000000e+01 : f32
    %422 = vector.broadcast %cst_121 : f32 to vector<2x2xf32>
    %423 = arith.addf %346, %422 : vector<2x2xf32>
    %424 = arith.select %399, %423, %419 : vector<2x2xi1>, vector<2x2xf32>
    %425 = arith.extui %399 : vector<2x2xi1> to vector<2x2xi32>
    %426 = arith.sitofp %425 : vector<2x2xi32> to vector<2x2xf32>
    %c0_122 = arith.constant 0 : index
    %c16 = arith.constant 16 : index
    %427 = vector.load %arg5[%c0_122, %c16] : memref<2x32xf32, #tpu.memory_space<vmem>>, vector<2x2xf32>
    tpu.vector_store %arg5[%c0_122, %c16], %426 {strides = array<i32>} : memref<2x32xf32, #tpu.memory_space<vmem>>, vector<2x2xf32>,
    %c0_123 = arith.constant 0 : index
    %c18 = arith.constant 18 : index
    %428 = vector.load %arg5[%c0_123, %c18] : memref<2x32xf32, #tpu.memory_space<vmem>>, vector<2x2xf32>
    tpu.vector_store %arg5[%c0_123, %c18], %421 {strides = array<i32>} : memref<2x32xf32, #tpu.memory_space<vmem>>, vector<2x2xf32>,
    %429 = vector.extract_strided_slice %20 {offsets = [5, 0, 0], sizes = [1, 2, 4], strides = [1, 1, 1]} : vector<8x2x4xf32> to vector<1x2x4xf32>
    %430 = vector.shape_cast %429 : vector<1x2x4xf32> to vector<2x4xf32>
    %cst_124 = arith.constant 15.489727 : f32
    %431 = vector.broadcast %cst_124 : f32 to vector<2x4xf32>
    %432 = arith.cmpf oge, %376, %431 : vector<2x4xf32>
    %cst_125 = arith.constant -77.402916 : f32
    %433 = vector.broadcast %cst_125 : f32 to vector<2x4xf32>
    %434 = arith.subf %376, %433 : vector<2x4xf32>
    %cst_126 = arith.constant 0.447181702 : f32
    %435 = vector.broadcast %cst_126 : f32 to vector<2x4xf32>
    %436 = arith.mulf %435, %434 : vector<2x4xf32>
    %cst_127 = arith.constant -44.9005432 : f32
    %437 = vector.broadcast %cst_127 : f32 to vector<2x4xf32>
    %438 = arith.subf %376, %437 : vector<2x4xf32>
    %439 = arith.mulf %436, %438 : vector<2x4xf32>
    %440 = arith.subf %439, %379 : vector<2x4xf32>
    %441 = arith.addf %440, %430 : vector<2x4xf32>
    %cst_128 = arith.constant 0.00263157906 : f32
    %442 = vector.broadcast %cst_128 : f32 to vector<2x4xf32>
    %443 = arith.mulf %442, %441 : vector<2x4xf32>
    %444 = arith.addf %376, %443 : vector<2x4xf32>
    %cst_129 = arith.constant -77.402916 : f32
    %445 = vector.broadcast %cst_129 : f32 to vector<2x4xf32>
    %446 = arith.subf %444, %445 : vector<2x4xf32>
    %cst_130 = arith.constant 0.00802877825 : f32
    %447 = vector.broadcast %cst_130 : f32 to vector<2x4xf32>
    %448 = arith.mulf %447, %446 : vector<2x4xf32>
    %449 = arith.addf %379, %448 : vector<2x4xf32>
    %cst_131 = arith.constant 3.27994087E-4 : f32
    %450 = vector.broadcast %cst_131 : f32 to vector<2x4xf32>
    %451 = arith.mulf %450, %379 : vector<2x4xf32>
    %452 = arith.subf %449, %451 : vector<2x4xf32>
    %cst_132 = arith.constant -66.4656372 : f32
    %453 = vector.broadcast %cst_132 : f32 to vector<2x4xf32>
    %454 = arith.select %432, %453, %444 : vector<2x4xi1>, vector<2x4xf32>
    %cst_133 = arith.constant 5.000000e+01 : f32
    %455 = vector.broadcast %cst_133 : f32 to vector<2x4xf32>
    %456 = arith.addf %379, %455 : vector<2x4xf32>
    %457 = arith.select %432, %456, %452 : vector<2x4xi1>, vector<2x4xf32>
    %458 = arith.extui %432 : vector<2x4xi1> to vector<2x4xi32>
    %459 = arith.sitofp %458 : vector<2x4xi32> to vector<2x4xf32>
    %460 = vector.extract_strided_slice %459 {offsets = [0, 0], sizes = [2, 1], strides = [1, 1]} : vector<2x4xf32> to vector<2x1xf32>
    %461 = vector.broadcast %460 : vector<2x1xf32> to vector<2x2xf32>
    %462 = arith.mulf %461, %23 : vector<2x2xf32>
    %463 = arith.addf %34, %462 : vector<2x2xf32>
    %464 = vector.extract_strided_slice %459 {offsets = [0, 1], sizes = [2, 1], strides = [1, 1]} : vector<2x4xf32> to vector<2x1xf32>
    %465 = vector.broadcast %464 : vector<2x1xf32> to vector<2x2xf32>
    %466 = arith.mulf %465, %26 : vector<2x2xf32>
    %467 = arith.addf %463, %466 : vector<2x2xf32>
    %468 = vector.extract_strided_slice %459 {offsets = [0, 2], sizes = [2, 1], strides = [1, 1]} : vector<2x4xf32> to vector<2x1xf32>
    %469 = vector.broadcast %468 : vector<2x1xf32> to vector<2x2xf32>
    %470 = arith.mulf %469, %29 : vector<2x2xf32>
    %471 = arith.addf %467, %470 : vector<2x2xf32>
    %472 = vector.extract_strided_slice %459 {offsets = [0, 3], sizes = [2, 1], strides = [1, 1]} : vector<2x4xf32> to vector<2x1xf32>
    %473 = vector.broadcast %472 : vector<2x1xf32> to vector<2x2xf32>
    %474 = arith.mulf %473, %32 : vector<2x2xf32>
    %475 = arith.addf %471, %474 : vector<2x2xf32>
    %cst_134 = arith.constant 15.489727 : f32
    %476 = vector.broadcast %cst_134 : f32 to vector<2x2xf32>
    %477 = arith.cmpf oge, %421, %476 : vector<2x2xf32>
    %cst_135 = arith.constant -77.402916 : f32
    %478 = vector.broadcast %cst_135 : f32 to vector<2x2xf32>
    %479 = arith.subf %421, %478 : vector<2x2xf32>
    %cst_136 = arith.constant 0.447181702 : f32
    %480 = vector.broadcast %cst_136 : f32 to vector<2x2xf32>
    %481 = arith.mulf %480, %479 : vector<2x2xf32>
    %cst_137 = arith.constant -44.9005432 : f32
    %482 = vector.broadcast %cst_137 : f32 to vector<2x2xf32>
    %483 = arith.subf %421, %482 : vector<2x2xf32>
    %484 = arith.mulf %481, %483 : vector<2x2xf32>
    %485 = arith.subf %484, %424 : vector<2x2xf32>
    %486 = arith.addf %485, %475 : vector<2x2xf32>
    %cst_138 = arith.constant 0.00263157906 : f32
    %487 = vector.broadcast %cst_138 : f32 to vector<2x2xf32>
    %488 = arith.mulf %487, %486 : vector<2x2xf32>
    %489 = arith.addf %421, %488 : vector<2x2xf32>
    %cst_139 = arith.constant -77.402916 : f32
    %490 = vector.broadcast %cst_139 : f32 to vector<2x2xf32>
    %491 = arith.subf %489, %490 : vector<2x2xf32>
    %cst_140 = arith.constant 0.00802877825 : f32
    %492 = vector.broadcast %cst_140 : f32 to vector<2x2xf32>
    %493 = arith.mulf %492, %491 : vector<2x2xf32>
    %494 = arith.addf %424, %493 : vector<2x2xf32>
    %cst_141 = arith.constant 3.27994087E-4 : f32
    %495 = vector.broadcast %cst_141 : f32 to vector<2x2xf32>
    %496 = arith.mulf %495, %424 : vector<2x2xf32>
    %497 = arith.subf %494, %496 : vector<2x2xf32>
    %cst_142 = arith.constant -66.4656372 : f32
    %498 = vector.broadcast %cst_142 : f32 to vector<2x2xf32>
    %499 = arith.select %477, %498, %489 : vector<2x2xi1>, vector<2x2xf32>
    %cst_143 = arith.constant 5.000000e+01 : f32
    %500 = vector.broadcast %cst_143 : f32 to vector<2x2xf32>
    %501 = arith.addf %424, %500 : vector<2x2xf32>
    %502 = arith.select %477, %501, %497 : vector<2x2xi1>, vector<2x2xf32>
    %503 = arith.extui %477 : vector<2x2xi1> to vector<2x2xi32>
    %504 = arith.sitofp %503 : vector<2x2xi32> to vector<2x2xf32>
    %c0_144 = arith.constant 0 : index
    %c20 = arith.constant 20 : index
    %505 = vector.load %arg5[%c0_144, %c20] : memref<2x32xf32, #tpu.memory_space<vmem>>, vector<2x2xf32>
    tpu.vector_store %arg5[%c0_144, %c20], %504 {strides = array<i32>} : memref<2x32xf32, #tpu.memory_space<vmem>>, vector<2x2xf32>,
    %c0_145 = arith.constant 0 : index
    %c22 = arith.constant 22 : index
    %506 = vector.load %arg5[%c0_145, %c22] : memref<2x32xf32, #tpu.memory_space<vmem>>, vector<2x2xf32>
    tpu.vector_store %arg5[%c0_145, %c22], %499 {strides = array<i32>} : memref<2x32xf32, #tpu.memory_space<vmem>>, vector<2x2xf32>,
    %507 = vector.extract_strided_slice %20 {offsets = [6, 0, 0], sizes = [1, 2, 4], strides = [1, 1, 1]} : vector<8x2x4xf32> to vector<1x2x4xf32>
    %508 = vector.shape_cast %507 : vector<1x2x4xf32> to vector<2x4xf32>
    %cst_146 = arith.constant 15.489727 : f32
    %509 = vector.broadcast %cst_146 : f32 to vector<2x4xf32>
    %510 = arith.cmpf oge, %454, %509 : vector<2x4xf32>
    %cst_147 = arith.constant -77.402916 : f32
    %511 = vector.broadcast %cst_147 : f32 to vector<2x4xf32>
    %512 = arith.subf %454, %511 : vector<2x4xf32>
    %cst_148 = arith.constant 0.447181702 : f32
    %513 = vector.broadcast %cst_148 : f32 to vector<2x4xf32>
    %514 = arith.mulf %513, %512 : vector<2x4xf32>
    %cst_149 = arith.constant -44.9005432 : f32
    %515 = vector.broadcast %cst_149 : f32 to vector<2x4xf32>
    %516 = arith.subf %454, %515 : vector<2x4xf32>
    %517 = arith.mulf %514, %516 : vector<2x4xf32>
    %518 = arith.subf %517, %457 : vector<2x4xf32>
    %519 = arith.addf %518, %508 : vector<2x4xf32>
    %cst_150 = arith.constant 0.00263157906 : f32
    %520 = vector.broadcast %cst_150 : f32 to vector<2x4xf32>
    %521 = arith.mulf %520, %519 : vector<2x4xf32>
    %522 = arith.addf %454, %521 : vector<2x4xf32>
    %cst_151 = arith.constant -66.4656372 : f32
    %523 = vector.broadcast %cst_151 : f32 to vector<2x4xf32>
    %524 = arith.select %510, %523, %522 : vector<2x4xi1>, vector<2x4xf32>
    %525 = arith.extui %510 : vector<2x4xi1> to vector<2x4xi32>
    %526 = arith.sitofp %525 : vector<2x4xi32> to vector<2x4xf32>
    %527 = vector.extract_strided_slice %526 {offsets = [0, 0], sizes = [2, 1], strides = [1, 1]} : vector<2x4xf32> to vector<2x1xf32>
    %528 = vector.broadcast %527 : vector<2x1xf32> to vector<2x2xf32>
    %529 = arith.mulf %528, %23 : vector<2x2xf32>
    %530 = arith.addf %34, %529 : vector<2x2xf32>
    %531 = vector.extract_strided_slice %526 {offsets = [0, 1], sizes = [2, 1], strides = [1, 1]} : vector<2x4xf32> to vector<2x1xf32>
    %532 = vector.broadcast %531 : vector<2x1xf32> to vector<2x2xf32>
    %533 = arith.mulf %532, %26 : vector<2x2xf32>
    %534 = arith.addf %530, %533 : vector<2x2xf32>
    %535 = vector.extract_strided_slice %526 {offsets = [0, 2], sizes = [2, 1], strides = [1, 1]} : vector<2x4xf32> to vector<2x1xf32>
    %536 = vector.broadcast %535 : vector<2x1xf32> to vector<2x2xf32>
    %537 = arith.mulf %536, %29 : vector<2x2xf32>
    %538 = arith.addf %534, %537 : vector<2x2xf32>
    %539 = vector.extract_strided_slice %526 {offsets = [0, 3], sizes = [2, 1], strides = [1, 1]} : vector<2x4xf32> to vector<2x1xf32>
    %540 = vector.broadcast %539 : vector<2x1xf32> to vector<2x2xf32>
    %541 = arith.mulf %540, %32 : vector<2x2xf32>
    %542 = arith.addf %538, %541 : vector<2x2xf32>
    %cst_152 = arith.constant 15.489727 : f32
    %543 = vector.broadcast %cst_152 : f32 to vector<2x2xf32>
    %544 = arith.cmpf oge, %499, %543 : vector<2x2xf32>
    %cst_153 = arith.constant -77.402916 : f32
    %545 = vector.broadcast %cst_153 : f32 to vector<2x2xf32>
    %546 = arith.subf %499, %545 : vector<2x2xf32>
    %cst_154 = arith.constant 0.447181702 : f32
    %547 = vector.broadcast %cst_154 : f32 to vector<2x2xf32>
    %548 = arith.mulf %547, %546 : vector<2x2xf32>
    %cst_155 = arith.constant -44.9005432 : f32
    %549 = vector.broadcast %cst_155 : f32 to vector<2x2xf32>
    %550 = arith.subf %499, %549 : vector<2x2xf32>
    %551 = arith.mulf %548, %550 : vector<2x2xf32>
    %552 = arith.subf %551, %502 : vector<2x2xf32>
    %553 = arith.addf %552, %542 : vector<2x2xf32>
    %cst_156 = arith.constant 0.00263157906 : f32
    %554 = vector.broadcast %cst_156 : f32 to vector<2x2xf32>
    %555 = arith.mulf %554, %553 : vector<2x2xf32>
    %556 = arith.addf %499, %555 : vector<2x2xf32>
    %cst_157 = arith.constant -77.402916 : f32
    %557 = vector.broadcast %cst_157 : f32 to vector<2x2xf32>
    %558 = arith.subf %556, %557 : vector<2x2xf32>
    %cst_158 = arith.constant 0.00802877825 : f32
    %559 = vector.broadcast %cst_158 : f32 to vector<2x2xf32>
    %560 = arith.mulf %559, %558 : vector<2x2xf32>
    %561 = arith.addf %502, %560 : vector<2x2xf32>
    %cst_159 = arith.constant 3.27994087E-4 : f32
    %562 = vector.broadcast %cst_159 : f32 to vector<2x2xf32>
    %563 = arith.mulf %562, %502 : vector<2x2xf32>
    %564 = arith.subf %561, %563 : vector<2x2xf32>
    %cst_160 = arith.constant -66.4656372 : f32
    %565 = vector.broadcast %cst_160 : f32 to vector<2x2xf32>
    %566 = arith.select %544, %565, %556 : vector<2x2xi1>, vector<2x2xf32>
    %cst_161 = arith.constant 5.000000e+01 : f32
    %567 = vector.broadcast %cst_161 : f32 to vector<2x2xf32>
    %568 = arith.addf %502, %567 : vector<2x2xf32>
    %569 = arith.select %544, %568, %564 : vector<2x2xi1>, vector<2x2xf32>
    %570 = arith.extui %544 : vector<2x2xi1> to vector<2x2xi32>
    %571 = arith.sitofp %570 : vector<2x2xi32> to vector<2x2xf32>
    %c0_162 = arith.constant 0 : index
    %c24 = arith.constant 24 : index
    %572 = vector.load %arg5[%c0_162, %c24] : memref<2x32xf32, #tpu.memory_space<vmem>>, vector<2x2xf32>
    tpu.vector_store %arg5[%c0_162, %c24], %571 {strides = array<i32>} : memref<2x32xf32, #tpu.memory_space<vmem>>, vector<2x2xf32>,
    %c0_163 = arith.constant 0 : index
    %c26 = arith.constant 26 : index
    %573 = vector.load %arg5[%c0_163, %c26] : memref<2x32xf32, #tpu.memory_space<vmem>>, vector<2x2xf32>
    tpu.vector_store %arg5[%c0_163, %c26], %566 {strides = array<i32>} : memref<2x32xf32, #tpu.memory_space<vmem>>, vector<2x2xf32>,
    %cst_164 = arith.constant 15.489727 : f32
    %574 = vector.broadcast %cst_164 : f32 to vector<2x4xf32>
    %575 = arith.cmpf oge, %524, %574 : vector<2x4xf32>
    %576 = arith.extui %575 : vector<2x4xi1> to vector<2x4xi32>
    %577 = arith.sitofp %576 : vector<2x4xi32> to vector<2x4xf32>
    %578 = vector.extract_strided_slice %577 {offsets = [0, 0], sizes = [2, 1], strides = [1, 1]} : vector<2x4xf32> to vector<2x1xf32>
    %579 = vector.broadcast %578 : vector<2x1xf32> to vector<2x2xf32>
    %580 = arith.mulf %579, %23 : vector<2x2xf32>
    %581 = arith.addf %34, %580 : vector<2x2xf32>
    %582 = vector.extract_strided_slice %577 {offsets = [0, 1], sizes = [2, 1], strides = [1, 1]} : vector<2x4xf32> to vector<2x1xf32>
    %583 = vector.broadcast %582 : vector<2x1xf32> to vector<2x2xf32>
    %584 = arith.mulf %583, %26 : vector<2x2xf32>
    %585 = arith.addf %581, %584 : vector<2x2xf32>
    %586 = vector.extract_strided_slice %577 {offsets = [0, 2], sizes = [2, 1], strides = [1, 1]} : vector<2x4xf32> to vector<2x1xf32>
    %587 = vector.broadcast %586 : vector<2x1xf32> to vector<2x2xf32>
    %588 = arith.mulf %587, %29 : vector<2x2xf32>
    %589 = arith.addf %585, %588 : vector<2x2xf32>
    %590 = vector.extract_strided_slice %577 {offsets = [0, 3], sizes = [2, 1], strides = [1, 1]} : vector<2x4xf32> to vector<2x1xf32>
    %591 = vector.broadcast %590 : vector<2x1xf32> to vector<2x2xf32>
    %592 = arith.mulf %591, %32 : vector<2x2xf32>
    %593 = arith.addf %589, %592 : vector<2x2xf32>
    %cst_165 = arith.constant 15.489727 : f32
    %594 = vector.broadcast %cst_165 : f32 to vector<2x2xf32>
    %595 = arith.cmpf oge, %566, %594 : vector<2x2xf32>
    %cst_166 = arith.constant -77.402916 : f32
    %596 = vector.broadcast %cst_166 : f32 to vector<2x2xf32>
    %597 = arith.subf %566, %596 : vector<2x2xf32>
    %cst_167 = arith.constant 0.447181702 : f32
    %598 = vector.broadcast %cst_167 : f32 to vector<2x2xf32>
    %599 = arith.mulf %598, %597 : vector<2x2xf32>
    %cst_168 = arith.constant -44.9005432 : f32
    %600 = vector.broadcast %cst_168 : f32 to vector<2x2xf32>
    %601 = arith.subf %566, %600 : vector<2x2xf32>
    %602 = arith.mulf %599, %601 : vector<2x2xf32>
    %603 = arith.subf %602, %569 : vector<2x2xf32>
    %604 = arith.addf %603, %593 : vector<2x2xf32>
    %cst_169 = arith.constant 0.00263157906 : f32
    %605 = vector.broadcast %cst_169 : f32 to vector<2x2xf32>
    %606 = arith.mulf %605, %604 : vector<2x2xf32>
    %607 = arith.addf %566, %606 : vector<2x2xf32>
    %cst_170 = arith.constant -66.4656372 : f32
    %608 = vector.broadcast %cst_170 : f32 to vector<2x2xf32>
    %609 = arith.select %595, %608, %607 : vector<2x2xi1>, vector<2x2xf32>
    %610 = arith.extui %595 : vector<2x2xi1> to vector<2x2xi32>
    %611 = arith.sitofp %610 : vector<2x2xi32> to vector<2x2xf32>
    %c0_171 = arith.constant 0 : index
    %c28 = arith.constant 28 : index
    %612 = vector.load %arg5[%c0_171, %c28] : memref<2x32xf32, #tpu.memory_space<vmem>>, vector<2x2xf32>
    tpu.vector_store %arg5[%c0_171, %c28], %611 {strides = array<i32>} : memref<2x32xf32, #tpu.memory_space<vmem>>, vector<2x2xf32>,
    %c0_172 = arith.constant 0 : index
    %c30 = arith.constant 30 : index
    %613 = vector.load %arg5[%c0_172, %c30] : memref<2x32xf32, #tpu.memory_space<vmem>>, vector<2x2xf32>
    tpu.vector_store %arg5[%c0_172, %c30], %609 {strides = array<i32>} : memref<2x32xf32, #tpu.memory_space<vmem>>, vector<2x2xf32>,
    return
  }
}

</mosaic_0001>

<llo_original>
// kernel: tpu_custom_call.1
$region0: #{tpu_custom_call.1}
  #allocation0 [shape = 'u32[]', space=smem, size = 0x4, offset = 0x4, fixed_abs, tag = 'smem constant byte address 0x4 - core index']
  #allocation1 [shape = 'u32[144,128]{1,0:T(1,128)}', space=vmem, size = 0x12000, scoped, tag = 'internal scratch']
  %s0 = inlined_call_operand.vmem [shape: f32[8,2,2], index: 0, kind: input, shape index: {}]
  %s1 = inlined_call_operand.vmem [shape: f32[2,4], index: 1, kind: input, shape index: {}]
  %s2 = inlined_call_operand.vmem [shape: f32[1,4], index: 2, kind: input, shape index: {}]
  %s3 = inlined_call_operand.vmem [shape: f32[4,2], index: 3, kind: input, shape index: {}]
  %s4 = inlined_call_operand.vmem [shape: f32[1,2], index: 4, kind: input, shape index: {}]
  %s5 = inlined_call_operand.hbm [shape: f32[2,32], index: 5, kind: output, shape index: {}]
  %s6 = sld [smem:[#allocation0]]
  $region30: #{tpu_custom_call.1} parent=0
    _
  %s8 = ssub.s32 1, %s6
  %s9 = scalar_select 0, %s8, %s6
  $region1: #{tpu_custom_call.1} parent=0
    #allocation2 [shape = 'u8[1024]{0}', space=vmem, size = 0x400, scoped, tag = 'output window, operand 0, single buffered']
    #allocation3 [shape = 's32[1]{0}', space=sflag, size = 0x4, scoped, tag = 'scoped memory for tpu_custom_call.1']
    %10 = vsyncpa [#allocation3], 0
    // Predicated region
    $region2: #{tpu_custom_call.1} parent=1 // pred_check
      _
    $region3: #{tpu_custom_call.1} parent=1 // pred_check_branch
      %12 = sbr.rel (0) target = $region5
    $region4: #{tpu_custom_call.1} parent=1 // pred_region
      _
    $region5: #{tpu_custom_call.1} parent=1 // pred_fallthru
      _
    // Predicated region
    $region6: #{tpu_custom_call.1} parent=1 // pred_check
      _
    $region7: #{tpu_custom_call.1} parent=1 // pred_check_branch
      %14 = sbr.rel (0) target = $region9
    $region8: #{tpu_custom_call.1} parent=1 // pred_region
      _
    $region9: #{tpu_custom_call.1} parent=1 // pred_fallthru
      _
    // Predicated region
    $region10: #{tpu_custom_call.1} parent=1 // pred_check
      _
    $region11: #{tpu_custom_call.1} parent=1 // pred_check_branch
      %16 = sbr.rel (0) target = $region13
    $region12: #{tpu_custom_call.1} parent=1 // pred_region
      _
    $region13: #{tpu_custom_call.1} parent=1 // pred_fallthru
      _
    // Predicated region
    $region14: #{tpu_custom_call.1} parent=1 // pred_check
      _
    $region15: #{tpu_custom_call.1} parent=1 // pred_check_branch
      %18 = sbr.rel (0) target = $region17
    $region16: #{tpu_custom_call.1} parent=1 // pred_region
      _
    $region17: #{tpu_custom_call.1} parent=1 // pred_fallthru
      _
    // Predicated region
    $region18: #{tpu_custom_call.1} parent=1 // pred_check
      _
    $region19: #{tpu_custom_call.1} parent=1 // pred_check_branch
      %20 = sbr.rel (0) target = $region21
    $region20: #{tpu_custom_call.1} parent=1 // pred_region
      _
    $region21: #{tpu_custom_call.1} parent=1 // pred_fallthru
      _
    %v21 = vld [vmem:[%s1] sm:$0x3]
    %v22 = vld [vmem:[%s2] sm:$0x1]
    %v23 = vld [vmem:[%s3] sm:$0xf]
    %v24 = vld [vmem:[%s4] sm:$0x1]
    %v25 = vld [vmem:[%s0] sm:$0x3]
    %v26 = vld [vmem:[%s0 + $0x2] sm:$0x3]
    %v27 = vld [vmem:[%s0 + $0x4] sm:$0x3]
    %v28 = vld [vmem:[%s0 + $0x6] sm:$0x3]
    %v29 = vld [vmem:[%s0 + $0x8] sm:$0x3]
    %v30 = vld [vmem:[%s0 + $0xa] sm:$0x3]
    %v31 = vld [vmem:[%s0 + $0xc] sm:$0x3]
    %33 = vset.pattern.permute.xlu0 0
    %34 = vperm.xlu0 %33, %v25
    %v35 = vpop.permute.xlu0 %34
    %38 = vset.pattern.permute.xlu0 0
    %39 = vperm.xlu0 %38, %v26
    %v40 = vpop.permute.xlu0 %39
    %43 = vset.pattern.permute.xlu0 0
    %44 = vperm.xlu0 %43, %v27
    %v45 = vpop.permute.xlu0 %44
    %48 = vset.pattern.permute.xlu0 0
    %49 = vperm.xlu0 %48, %v28
    %v50 = vpop.permute.xlu0 %49
    %53 = vset.pattern.permute.xlu0 0
    %54 = vperm.xlu0 %53, %v29
    %v55 = vpop.permute.xlu0 %54
    %58 = vset.pattern.permute.xlu0 0
    %59 = vperm.xlu0 %58, %v30
    %v60 = vpop.permute.xlu0 %59
    %63 = vset.pattern.permute.xlu0 0
    %64 = vperm.xlu0 %63, %v31
    %v65 = vpop.permute.xlu0 %64
    %v67 = vlaneseq
    %v68 = vshrl.u32 %v67, 7
    %v69 = vsub.s32 0, %v68
    %v70 = vrot.slane %v21, %v69
    %v71 = vmul.f32 %v35, %v70
    %v72 = vmul.f32 %v40, %v70
    %v73 = vmul.f32 %v45, %v70
    %v74 = vmul.f32 %v50, %v70
    %v75 = vmul.f32 %v55, %v70
    %v76 = vmul.f32 %v60, %v70
    %v77 = vmul.f32 %v65, %v70
    %78 = vset.pattern.permute.xlu0 1
    %79 = vperm.xlu0 %78, %v25
    %v80 = vpop.permute.xlu0 %79
    %82 = vset.pattern.permute.xlu0 1
    %83 = vperm.xlu0 %82, %v26
    %v84 = vpop.permute.xlu0 %83
    %86 = vset.pattern.permute.xlu0 1
    %87 = vperm.xlu0 %86, %v27
    %v88 = vpop.permute.xlu0 %87
    %90 = vset.pattern.permute.xlu0 1
    %91 = vperm.xlu0 %90, %v28
    %v92 = vpop.permute.xlu0 %91
    %94 = vset.pattern.permute.xlu0 1
    %95 = vperm.xlu0 %94, %v29
    %v96 = vpop.permute.xlu0 %95
    %98 = vset.pattern.permute.xlu0 1
    %99 = vperm.xlu0 %98, %v30
    %v100 = vpop.permute.xlu0 %99
    %102 = vset.pattern.permute.xlu0 1
    %103 = vperm.xlu0 %102, %v31
    %v104 = vpop.permute.xlu0 %103
    %v106 = vlaneseq
    %v107 = vshrl.u32 %v106, 7
    %v108 = vsub.s32 1, %v107
    %v109 = vrot.slane %v21, %v108
    %v110 = vmul.f32 %v80, %v109
    %v111 = vmul.f32 %v84, %v109
    %v112 = vmul.f32 %v88, %v109
    %v113 = vmul.f32 %v92, %v109
    %v114 = vmul.f32 %v96, %v109
    %v115 = vmul.f32 %v100, %v109
    %v116 = vmul.f32 %v104, %v109
    %v117 = vadd.f32 %v71, %v110
    %v118 = vadd.f32 %v72, %v111
    %v119 = vadd.f32 %v73, %v112
    %v120 = vadd.f32 %v74, %v113
    %v121 = vadd.f32 %v75, %v114
    %v122 = vadd.f32 %v76, %v115
    %v123 = vadd.f32 %v77, %v116
    %v125 = vlaneseq
    %v126 = vshrl.u32 %v125, 7
    %v127 = vsub.s32 0, %v126
    %v128 = vrot.slane %v22, %v127
    %v130 = vadd.f32 %v117, %v128
    %v131 = vadd.f32 %v118, %v128
    %v132 = vadd.f32 %v119, %v128
    %v133 = vadd.f32 %v120, %v128
    %v134 = vadd.f32 %v121, %v128
    %v135 = vadd.f32 %v122, %v128
    %v136 = vadd.f32 %v123, %v128
    %v137 = vlaneseq
    %v138 = vshrl.u32 %v137, 7
    %v139 = vsub.s32 0, %v138
    %v140 = vrot.slane %v23, %v139
    %v141 = vlaneseq
    %v142 = vshrl.u32 %v141, 7
    %v143 = vsub.s32 1, %v142
    %v144 = vrot.slane %v23, %v143
    %v145 = vlaneseq
    %v146 = vshrl.u32 %v145, 7
    %v147 = vsub.s32 2, %v146
    %v148 = vrot.slane %v23, %v147
    %v149 = vlaneseq
    %v150 = vshrl.u32 %v149, 7
    %v151 = vsub.s32 3, %v150
    %v152 = vrot.slane %v23, %v151
    %v154 = vlaneseq
    %v155 = vshrl.u32 %v154, 7
    %v156 = vsub.s32 0, %v155
    %v157 = vrot.slane %v24, %v156
    %vm159 = vcmp.ge.f32.partialorder -77.402916, 15.489727
    %v160 = vmul.f32 %v130, 0.002631579
    %v161 = vadd.f32 %v160, -77.402916
    %v162 = vsub.f32 %v161, -77.402916
    %v163 = vmul.f32 %v162, 0.008028778
    %v164 = vadd.f32 %v163, 0.0
    %v165 = vsel %vm159, -66.46564, %v161
    %v166 = vsel %vm159, 50.0, %v164
    %v167 = vsel %vm159, 1, 0
    %v168 = vcvt.s32.f32 %v167
    %v169 = vmul.f32 %v168, %v140
    %v170 = vadd.f32 %v157, %v169
    %v171 = vmul.f32 %v168, %v144
    %v172 = vadd.f32 %v170, %v171
    %v173 = vmul.f32 %v168, %v148
    %v174 = vadd.f32 %v172, %v173
    %v175 = vmul.f32 %v168, %v152
    %v176 = vadd.f32 %v174, %v175
    %v177 = vmul.f32 %v176, 0.002631579
    %v178 = vadd.f32 %v177, -77.402916
    %v179 = vsub.f32 %v178, -77.402916
    %v180 = vmul.f32 %v179, 0.008028778
    %v181 = vadd.f32 %v180, 0.0
    %v182 = vsel %vm159, -66.46564, %v178
    %v183 = vsel %vm159, 50.0, %v181
    %vm184 = vcmask 9216
    %185 = vst.msk [vmem:[#allocation2] sm:$0x3] %vm184, %v168
    %187 = vrot.lane.b32.xlu0 %v182, 2
    %v188 = vpop.permute.xlu0 %187
    %vm190 = vcmask 25616
    %191 = vst.msk [vmem:[#allocation2] sm:$0x3] %vm190, %v188
    %vm192 = vcmp.ge.f32.partialorder %v165, 15.489727
    %v193 = vsub.f32 %v165, -77.402916
    %v194 = vmul.f32 %v193, 0.4471817
    %v195 = vsub.f32 %v165, -44.900543
    %v196 = vmul.f32 %v194, %v195
    %v197 = vsub.f32 %v196, %v166
    %v198 = vadd.f32 %v197, %v131
    %v199 = vmul.f32 %v198, 0.002631579
    %v200 = vadd.f32 %v165, %v199
    %v201 = vsub.f32 %v200, -77.402916
    %v202 = vmul.f32 %v201, 0.008028778
    %v203 = vadd.f32 %v166, %v202
    %v204 = vmul.f32 %v166, 0.0003279941
    %v205 = vsub.f32 %v203, %v204
    %v206 = vsel %vm192, -66.46564, %v200
    %v207 = vadd.f32 %v166, 50.0
    %v208 = vsel %vm192, %v207, %v205
    %v209 = vsel %vm192, 1, 0
    %v210 = vcvt.s32.f32 %v209
    %212 = vset.pattern.permute.xlu0 0
    %213 = vperm.xlu0 %212, %v210
    %v214 = vpop.permute.xlu0 %213
    %v216 = vmul.f32 %v214, %v140
    %v217 = vadd.f32 %v157, %v216
    %218 = vset.pattern.permute.xlu0 1
    %219 = vperm.xlu0 %218, %v210
    %v220 = vpop.permute.xlu0 %219
    %v222 = vmul.f32 %v220, %v144
    %v223 = vadd.f32 %v217, %v222
    %224 = vset.pattern.permute.xlu0 2
    %225 = vperm.xlu0 %224, %v210
    %v226 = vpop.permute.xlu0 %225
    %v228 = vmul.f32 %v226, %v148
    %v229 = vadd.f32 %v223, %v228
    %230 = vset.pattern.permute.xlu0 3
    %231 = vperm.xlu0 %230, %v210
    %v232 = vpop.permute.xlu0 %231
    %v234 = vmul.f32 %v232, %v152
    %v235 = vadd.f32 %v229, %v234
    %vm236 = vcmp.ge.f32.partialorder %v182, 15.489727
    %v237 = vsub.f32 %v182, -77.402916
    %v238 = vmul.f32 %v237, 0.4471817
    %v239 = vsub.f32 %v182, -44.900543
    %v240 = vmul.f32 %v238, %v239
    %v241 = vsub.f32 %v240, %v183
    %v242 = vadd.f32 %v241, %v235
    %v243 = vmul.f32 %v242, 0.002631579
    %v244 = vadd.f32 %v182, %v243
    %v245 = vsub.f32 %v244, -77.402916
    %v246 = vmul.f32 %v245, 0.008028778
    %v247 = vadd.f32 %v183, %v246
    %v248 = vmul.f32 %v183, 0.0003279941
    %v249 = vsub.f32 %v247, %v248
    %v250 = vsel %vm236, -66.46564, %v244
    %v251 = vadd.f32 %v183, 50.0
    %v252 = vsel %vm236, %v251, %v249
    %v253 = vsel %vm236, 1, 0
    %v254 = vcvt.s32.f32 %v253
    %256 = vrot.lane.b32.xlu0 %v254, 4
    %v257 = vpop.permute.xlu0 %256
    %vm259 = vcmask 42016
    %260 = vst.msk [vmem:[#allocation2] sm:$0x3] %vm259, %v257
    %262 = vrot.lane.b32.xlu0 %v250, 6
    %v263 = vpop.permute.xlu0 %262
    %vm265 = vcmask 58416
    %266 = vst.msk [vmem:[#allocation2] sm:$0x3] %vm265, %v263
    %vm267 = vcmp.ge.f32.partialorder %v206, 15.489727
    %v268 = vsub.f32 %v206, -77.402916
    %v269 = vmul.f32 %v268, 0.4471817
    %v270 = vsub.f32 %v206, -44.900543
    %v271 = vmul.f32 %v269, %v270
    %v272 = vsub.f32 %v271, %v208
    %v273 = vadd.f32 %v272, %v132
    %v274 = vmul.f32 %v273, 0.002631579
    %v275 = vadd.f32 %v206, %v274
    %v276 = vsub.f32 %v275, -77.402916
    %v277 = vmul.f32 %v276, 0.008028778
    %v278 = vadd.f32 %v208, %v277
    %v279 = vmul.f32 %v208, 0.0003279941
    %v280 = vsub.f32 %v278, %v279
    %v281 = vsel %vm267, -66.46564, %v275
    %v282 = vadd.f32 %v208, 50.0
    %v283 = vsel %vm267, %v282, %v280
    %v284 = vsel %vm267, 1, 0
    %v285 = vcvt.s32.f32 %v284
    %287 = vset.pattern.permute.xlu0 0
    %288 = vperm.xlu0 %287, %v285
    %v289 = vpop.permute.xlu0 %288
    %v291 = vmul.f32 %v289, %v140
    %v292 = vadd.f32 %v157, %v291
    %293 = vset.pattern.permute.xlu0 1
    %294 = vperm.xlu0 %293, %v285
    %v295 = vpop.permute.xlu0 %294
    %v297 = vmul.f32 %v295, %v144
    %v298 = vadd.f32 %v292, %v297
    %299 = vset.pattern.permute.xlu0 2
    %300 = vperm.xlu0 %299, %v285
    %v301 = vpop.permute.xlu0 %300
    %v303 = vmul.f32 %v301, %v148
    %v304 = vadd.f32 %v298, %v303
    %305 = vset.pattern.permute.xlu0 3
    %306 = vperm.xlu0 %305, %v285
    %v307 = vpop.permute.xlu0 %306
    %v309 = vmul.f32 %v307, %v152
    %v310 = vadd.f32 %v304, %v309
    %vm311 = vcmp.ge.f32.partialorder %v250, 15.489727
    %v312 = vsub.f32 %v250, -77.402916
    %v313 = vmul.f32 %v312, 0.4471817
    %v314 = vsub.f32 %v250, -44.900543
    %v315 = vmul.f32 %v313, %v314
    %v316 = vsub.f32 %v315, %v252
    %v317 = vadd.f32 %v316, %v310
    %v318 = vmul.f32 %v317, 0.002631579
    %v319 = vadd.f32 %v250, %v318
    %v320 = vsub.f32 %v319, -77.402916
    %v321 = vmul.f32 %v320, 0.008028778
    %v322 = vadd.f32 %v252, %v321
    %v323 = vmul.f32 %v252, 0.0003279941
    %v324 = vsub.f32 %v322, %v323
    %v325 = vsel %vm311, -66.46564, %v319
    %v326 = vadd.f32 %v252, 50.0
    %v327 = vsel %vm311, %v326, %v324
    %v328 = vsel %vm311, 1, 0
    %v329 = vcvt.s32.f32 %v328
    %331 = vrot.lane.b32.xlu0 %v329, 8
    %v332 = vpop.permute.xlu0 %331
    %vm334 = vcmask 74816
    %335 = vst.msk [vmem:[#allocation2] sm:$0x3] %vm334, %v332
    %337 = vrot.lane.b32.xlu0 %v325, 10
    %v338 = vpop.permute.xlu0 %337
    %vm340 = vcmask 91216
    %341 = vst.msk [vmem:[#allocation2] sm:$0x3] %vm340, %v338
    %vm342 = vcmp.ge.f32.partialorder %v281, 15.489727
    %v343 = vsub.f32 %v281, -77.402916
    %v344 = vmul.f32 %v343, 0.4471817
    %v345 = vsub.f32 %v281, -44.900543
    %v346 = vmul.f32 %v344, %v345
    %v347 = vsub.f32 %v346, %v283
    %v348 = vadd.f32 %v347, %v133
    %v349 = vmul.f32 %v348, 0.002631579
    %v350 = vadd.f32 %v281, %v349
    %v351 = vsub.f32 %v350, -77.402916
    %v352 = vmul.f32 %v351, 0.008028778
    %v353 = vadd.f32 %v283, %v352
    %v354 = vmul.f32 %v283, 0.0003279941
    %v355 = vsub.f32 %v353, %v354
    %v356 = vsel %vm342, -66.46564, %v350
    %v357 = vadd.f32 %v283, 50.0
    %v358 = vsel %vm342, %v357, %v355
    %v359 = vsel %vm342, 1, 0
    %v360 = vcvt.s32.f32 %v359
    %362 = vset.pattern.permute.xlu0 0
    %363 = vperm.xlu0 %362, %v360
    %v364 = vpop.permute.xlu0 %363
    %v366 = vmul.f32 %v364, %v140
    %v367 = vadd.f32 %v157, %v366
    %368 = vset.pattern.permute.xlu0 1
    %369 = vperm.xlu0 %368, %v360
    %v370 = vpop.permute.xlu0 %369
    %v372 = vmul.f32 %v370, %v144
    %v373 = vadd.f32 %v367, %v372
    %374 = vset.pattern.permute.xlu0 2
    %375 = vperm.xlu0 %374, %v360
    %v376 = vpop.permute.xlu0 %375
    %v378 = vmul.f32 %v376, %v148
    %v379 = vadd.f32 %v373, %v378
    %380 = vset.pattern.permute.xlu0 3
    %381 = vperm.xlu0 %380, %v360
    %v382 = vpop.permute.xlu0 %381
    %v384 = vmul.f32 %v382, %v152
    %v385 = vadd.f32 %v379, %v384
    %vm386 = vcmp.ge.f32.partialorder %v325, 15.489727
    %v387 = vsub.f32 %v325, -77.402916
    %v388 = vmul.f32 %v387, 0.4471817
    %v389 = vsub.f32 %v325, -44.900543
    %v390 = vmul.f32 %v388, %v389
    %v391 = vsub.f32 %v390, %v327
    %v392 = vadd.f32 %v391, %v385
    %v393 = vmul.f32 %v392, 0.002631579
    %v394 = vadd.f32 %v325, %v393
    %v395 = vsub.f32 %v394, -77.402916
    %v396 = vmul.f32 %v395, 0.008028778
    %v397 = vadd.f32 %v327, %v396
    %v398 = vmul.f32 %v327, 0.0003279941
    %v399 = vsub.f32 %v397, %v398
    %v400 = vsel %vm386, -66.46564, %v394
    %v401 = vadd.f32 %v327, 50.0
    %v402 = vsel %vm386, %v401, %v399
    %v403 = vsel %vm386, 1, 0
    %v404 = vcvt.s32.f32 %v403
    %406 = vrot.lane.b32.xlu0 %v404, 12
    %v407 = vpop.permute.xlu0 %406
    %vm409 = vcmask 107616
    %410 = vst.msk [vmem:[#allocation2] sm:$0x3] %vm409, %v407
    %412 = vrot.lane.b32.xlu0 %v400, 14
    %v413 = vpop.permute.xlu0 %412
    %vm415 = vcmask 124016
    %416 = vst.msk [vmem:[#allocation2] sm:$0x3] %vm415, %v413
    %vm417 = vcmp.ge.f32.partialorder %v356, 15.489727
    %v418 = vsub.f32 %v356, -77.402916
    %v419 = vmul.f32 %v418, 0.4471817
    %v420 = vsub.f32 %v356, -44.900543
    %v421 = vmul.f32 %v419, %v420
    %v422 = vsub.f32 %v421, %v358
    %v423 = vadd.f32 %v422, %v134
    %v424 = vmul.f32 %v423, 0.002631579
    %v425 = vadd.f32 %v356, %v424
    %v426 = vsub.f32 %v425, -77.402916
    %v427 = vmul.f32 %v426, 0.008028778
    %v428 = vadd.f32 %v358, %v427
    %v429 = vmul.f32 %v358, 0.0003279941
    %v430 = vsub.f32 %v428, %v429
    %v431 = vsel %vm417, -66.46564, %v425
    %v432 = vadd.f32 %v358, 50.0
    %v433 = vsel %vm417, %v432, %v430
    %v434 = vsel %vm417, 1, 0
    %v435 = vcvt.s32.f32 %v434
    %437 = vset.pattern.permute.xlu0 0
    %438 = vperm.xlu0 %437, %v435
    %v439 = vpop.permute.xlu0 %438
    %v441 = vmul.f32 %v439, %v140
    %v442 = vadd.f32 %v157, %v441
    %443 = vset.pattern.permute.xlu0 1
    %444 = vperm.xlu0 %443, %v435
    %v445 = vpop.permute.xlu0 %444
    %v447 = vmul.f32 %v445, %v144
    %v448 = vadd.f32 %v442, %v447
    %449 = vset.pattern.permute.xlu0 2
    %450 = vperm.xlu0 %449, %v435
    %v451 = vpop.permute.xlu0 %450
    %v453 = vmul.f32 %v451, %v148
    %v454 = vadd.f32 %v448, %v453
    %455 = vset.pattern.permute.xlu0 3
    %456 = vperm.xlu0 %455, %v435
    %v457 = vpop.permute.xlu0 %456
    %v459 = vmul.f32 %v457, %v152
    %v460 = vadd.f32 %v454, %v459
    %vm461 = vcmp.ge.f32.partialorder %v400, 15.489727
    %v462 = vsub.f32 %v400, -77.402916
    %v463 = vmul.f32 %v462, 0.4471817
    %v464 = vsub.f32 %v400, -44.900543
    %v465 = vmul.f32 %v463, %v464
    %v466 = vsub.f32 %v465, %v402
    %v467 = vadd.f32 %v466, %v460
    %v468 = vmul.f32 %v467, 0.002631579
    %v469 = vadd.f32 %v400, %v468
    %v470 = vsub.f32 %v469, -77.402916
    %v471 = vmul.f32 %v470, 0.008028778
    %v472 = vadd.f32 %v402, %v471
    %v473 = vmul.f32 %v402, 0.0003279941
    %v474 = vsub.f32 %v472, %v473
    %v475 = vsel %vm461, -66.46564, %v469
    %v476 = vadd.f32 %v402, 50.0
    %v477 = vsel %vm461, %v476, %v474
    %v478 = vsel %vm461, 1, 0
    %v479 = vcvt.s32.f32 %v478
    %481 = vrot.lane.b32.xlu0 %v479, 16
    %v482 = vpop.permute.xlu0 %481
    %vm484 = vcmask 140416
    %485 = vst.msk [vmem:[#allocation2] sm:$0x3] %vm484, %v482
    %487 = vrot.lane.b32.xlu0 %v475, 18
    %v488 = vpop.permute.xlu0 %487
    %vm490 = vcmask 156816
    %491 = vst.msk [vmem:[#allocation2] sm:$0x3] %vm490, %v488
    %vm492 = vcmp.ge.f32.partialorder %v431, 15.489727
    %v493 = vsub.f32 %v431, -77.402916
    %v494 = vmul.f32 %v493, 0.4471817
    %v495 = vsub.f32 %v431, -44.900543
    %v496 = vmul.f32 %v494, %v495
    %v497 = vsub.f32 %v496, %v433
    %v498 = vadd.f32 %v497, %v135
    %v499 = vmul.f32 %v498, 0.002631579
    %v500 = vadd.f32 %v431, %v499
    %v501 = vsub.f32 %v500, -77.402916
    %v502 = vmul.f32 %v501, 0.008028778
    %v503 = vadd.f32 %v433, %v502
    %v504 = vmul.f32 %v433, 0.0003279941
    %v505 = vsub.f32 %v503, %v504
    %v506 = vsel %vm492, -66.46564, %v500
    %v507 = vadd.f32 %v433, 50.0
    %v508 = vsel %vm492, %v507, %v505
    %v509 = vsel %vm492, 1, 0
    %v510 = vcvt.s32.f32 %v509
    %512 = vset.pattern.permute.xlu0 0
    %513 = vperm.xlu0 %512, %v510
    %v514 = vpop.permute.xlu0 %513
    %v516 = vmul.f32 %v514, %v140
    %v517 = vadd.f32 %v157, %v516
    %518 = vset.pattern.permute.xlu0 1
    %519 = vperm.xlu0 %518, %v510
    %v520 = vpop.permute.xlu0 %519
    %v522 = vmul.f32 %v520, %v144
    %v523 = vadd.f32 %v517, %v522
    %524 = vset.pattern.permute.xlu0 2
    %525 = vperm.xlu0 %524, %v510
    %v526 = vpop.permute.xlu0 %525
    %v528 = vmul.f32 %v526, %v148
    %v529 = vadd.f32 %v523, %v528
    %530 = vset.pattern.permute.xlu0 3
    %531 = vperm.xlu0 %530, %v510
    %v532 = vpop.permute.xlu0 %531
    %v534 = vmul.f32 %v532, %v152
    %v535 = vadd.f32 %v529, %v534
    %vm536 = vcmp.ge.f32.partialorder %v475, 15.489727
    %v537 = vsub.f32 %v475, -77.402916
    %v538 = vmul.f32 %v537, 0.4471817
    %v539 = vsub.f32 %v475, -44.900543
    %v540 = vmul.f32 %v538, %v539
    %v541 = vsub.f32 %v540, %v477
    %v542 = vadd.f32 %v541, %v535
    %v543 = vmul.f32 %v542, 0.002631579
    %v544 = vadd.f32 %v475, %v543
    %v545 = vsub.f32 %v544, -77.402916
    %v546 = vmul.f32 %v545, 0.008028778
    %v547 = vadd.f32 %v477, %v546
    %v548 = vmul.f32 %v477, 0.0003279941
    %v549 = vsub.f32 %v547, %v548
    %v550 = vsel %vm536, -66.46564, %v544
    %v551 = vadd.f32 %v477, 50.0
    %v552 = vsel %vm536, %v551, %v549
    %v553 = vsel %vm536, 1, 0
    %v554 = vcvt.s32.f32 %v553
    %556 = vrot.lane.b32.xlu0 %v554, 20
    %v557 = vpop.permute.xlu0 %556
    %vm559 = vcmask 173216
    %560 = vst.msk [vmem:[#allocation2] sm:$0x3] %vm559, %v557
    %562 = vrot.lane.b32.xlu0 %v550, 22
    %v563 = vpop.permute.xlu0 %562
    %vm565 = vcmask 189616
    %566 = vst.msk [vmem:[#allocation2] sm:$0x3] %vm565, %v563
    %vm567 = vcmp.ge.f32.partialorder %v506, 15.489727
    %v568 = vsub.f32 %v506, -77.402916
    %v569 = vmul.f32 %v568, 0.4471817
    %v570 = vsub.f32 %v506, -44.900543
    %v571 = vmul.f32 %v569, %v570
    %v572 = vsub.f32 %v571, %v508
    %v573 = vadd.f32 %v572, %v136
    %v574 = vmul.f32 %v573, 0.002631579
    %v575 = vadd.f32 %v506, %v574
    %v576 = vsel %vm567, -66.46564, %v575
    %v577 = vsel %vm567, 1, 0
    %v578 = vcvt.s32.f32 %v577
    %580 = vset.pattern.permute.xlu0 0
    %581 = vperm.xlu0 %580, %v578
    %v582 = vpop.permute.xlu0 %581
    %v584 = vmul.f32 %v582, %v140
    %v585 = vadd.f32 %v157, %v584
    %586 = vset.pattern.permute.xlu0 1
    %587 = vperm.xlu0 %586, %v578
    %v588 = vpop.permute.xlu0 %587
    %v590 = vmul.f32 %v588, %v144
    %v591 = vadd.f32 %v585, %v590
    %592 = vset.pattern.permute.xlu0 2
    %593 = vperm.xlu0 %592, %v578
    %v594 = vpop.permute.xlu0 %593
    %v596 = vmul.f32 %v594, %v148
    %v597 = vadd.f32 %v591, %v596
    %598 = vset.pattern.permute.xlu0 3
    %599 = vperm.xlu0 %598, %v578
    %v600 = vpop.permute.xlu0 %599
    %v602 = vmul.f32 %v600, %v152
    %v603 = vadd.f32 %v597, %v602
    %vm604 = vcmp.ge.f32.partialorder %v550, 15.489727
    %v605 = vsub.f32 %v550, -77.402916
    %v606 = vmul.f32 %v605, 0.4471817
    %v607 = vsub.f32 %v550, -44.900543
    %v608 = vmul.f32 %v606, %v607
    %v609 = vsub.f32 %v608, %v552
    %v610 = vadd.f32 %v609, %v603
    %v611 = vmul.f32 %v610, 0.002631579
    %v612 = vadd.f32 %v550, %v611
    %v613 = vsub.f32 %v612, -77.402916
    %v614 = vmul.f32 %v613, 0.008028778
    %v615 = vadd.f32 %v552, %v614
    %v616 = vmul.f32 %v552, 0.0003279941
    %v617 = vsub.f32 %v615, %v616
    %v618 = vsel %vm604, -66.46564, %v612
    %v619 = vadd.f32 %v552, 50.0
    %v620 = vsel %vm604, %v619, %v617
    %v621 = vsel %vm604, 1, 0
    %v622 = vcvt.s32.f32 %v621
    %624 = vrot.lane.b32.xlu0 %v622, 24
    %v625 = vpop.permute.xlu0 %624
    %vm627 = vcmask 206016
    %628 = vst.msk [vmem:[#allocation2] sm:$0x3] %vm627, %v625
    %630 = vrot.lane.b32.xlu0 %v618, 26
    %v631 = vpop.permute.xlu0 %630
    %vm633 = vcmask 222416
    %634 = vst.msk [vmem:[#allocation2] sm:$0x3] %vm633, %v631
    %vm635 = vcmp.ge.f32.partialorder %v576, 15.489727
    %v636 = vsel %vm635, 1, 0
    %v637 = vcvt.s32.f32 %v636
    %639 = vset.pattern.permute.xlu0 0
    %640 = vperm.xlu0 %639, %v637
    %v641 = vpop.permute.xlu0 %640
    %v643 = vmul.f32 %v641, %v140
    %v644 = vadd.f32 %v157, %v643
    %645 = vset.pattern.permute.xlu0 1
    %646 = vperm.xlu0 %645, %v637
    %v647 = vpop.permute.xlu0 %646
    %v649 = vmul.f32 %v647, %v144
    %v650 = vadd.f32 %v644, %v649
    %651 = vset.pattern.permute.xlu0 2
    %652 = vperm.xlu0 %651, %v637
    %v653 = vpop.permute.xlu0 %652
    %v655 = vmul.f32 %v653, %v148
    %v656 = vadd.f32 %v650, %v655
    %657 = vset.pattern.permute.xlu0 3
    %658 = vperm.xlu0 %657, %v637
    %v659 = vpop.permute.xlu0 %658
    %v661 = vmul.f32 %v659, %v152
    %v662 = vadd.f32 %v656, %v661
    %vm663 = vcmp.ge.f32.partialorder %v618, 15.489727
    %v664 = vsub.f32 %v618, -77.402916
    %v665 = vmul.f32 %v664, 0.4471817
    %v666 = vsub.f32 %v618, -44.900543
    %v667 = vmul.f32 %v665, %v666
    %v668 = vsub.f32 %v667, %v620
    %v669 = vadd.f32 %v668, %v662
    %v670 = vmul.f32 %v669, 0.002631579
    %v671 = vadd.f32 %v618, %v670
    %v672 = vsel %vm663, -66.46564, %v671
    %v673 = vsel %vm663, 1, 0
    %v674 = vcvt.s32.f32 %v673
    %676 = vrot.lane.b32.xlu0 %v674, 28
    %v677 = vpop.permute.xlu0 %676
    %vm679 = vcmask 238816
    %680 = vst.msk [vmem:[#allocation2] sm:$0x3] %vm679, %v677
    %682 = vrot.lane.b32.xlu0 %v672, 30
    %v683 = vpop.permute.xlu0 %682
    %vm685 = vcmask 255216
    %686 = vst.msk [vmem:[#allocation2] sm:$0x3] %vm685, %v683
    // Predicated region
    $region22: #{tpu_custom_call.1} parent=1 // pred_check
      _
    $region23: #{tpu_custom_call.1} parent=1 // pred_check_branch
      %688 = sbr.rel (0) target = $region25
    $region24: #{tpu_custom_call.1} parent=1 // pred_region
      %s690 = ssub.s32 32, 32
      %691 = vsyncadd [#allocation3], %s690
      %s693 = sshll.u32 [#allocation2], 4
      %s694 = int_to_ptr.vmem [resolvable:$true] %s693
      %696 = dma.vmem_to_hbm [thread:$0]  %s694, 32, %s5, [#allocation3]
    $region25: #{tpu_custom_call.1} parent=1 // pred_fallthru
      _
    // Predicated region
    $region26: #{tpu_custom_call.1} parent=1 // pred_check
      _
    $region27: #{tpu_custom_call.1} parent=1 // pred_check_branch
      %698 = sbr.rel (0) target = $region29
    $region28: #{tpu_custom_call.1} parent=1 // pred_region
      %699 = dma.done [#allocation3], 32
    $region29: #{tpu_custom_call.1} parent=1 // pred_fallthru
      _
    %700 = vsyncpa [#allocation3], 1

</llo_original>
